<compile_context>
chip_gen: v6e
topology: v6e:2x2x1
jax: 0.10.0
libtpu: 0.0.40
codegen_flags: <defaults>
</compile_context>

<pallas_src>
import functools

import jax
import jax.numpy as jnp
from jax.experimental import pallas as pl
from jax.experimental.pallas import tpu as pltpu


def node_encoder_kernel(feat_ref, nbr_ref,
                        w1_ref, b1_ref,        # feat_encode
                        w2_ref, b2_ref,        # neighbor_encode
                        w3a_ref, w3b_ref, b3_ref,  # latent_encode (split, no concat)
                        wmv_ref, bmv_ref,      # fused mean|log_var head
                        eps_ref,               # reparameterization noise
                        mv_ref, z_ref):
    # h1 = relu(feat @ W1 + b1)
    h1 = jnp.maximum(
        jnp.dot(feat_ref[...], w1_ref[...], preferred_element_type=jnp.float32)
        + b1_ref[...], 0.0)
    # h2 = relu(neighbor_feat @ W2 + b2)
    h2 = jnp.maximum(
        jnp.dot(nbr_ref[...], w2_ref[...], preferred_element_type=jnp.float32)
        + b2_ref[...], 0.0)
    # h3 = relu(cat(h1, h2) @ W3 + b3)  ==  relu(h1 @ W3a + h2 @ W3b + b3)
    h3 = jnp.maximum(
        jnp.dot(h1, w3a_ref[...], preferred_element_type=jnp.float32)
        + jnp.dot(h2, w3b_ref[...], preferred_element_type=jnp.float32)
        + b3_ref[...], 0.0)
    # fused heads: mv = [mean | log_var], lane-dense 2*latent_dim wide
    mv = jnp.dot(h3, wmv_ref[...], preferred_element_type=jnp.float32) + bmv_ref[...]
    latent = z_ref.shape[-1]
    mean = mv[:, :latent]
    logvar = mv[:, latent:]
    # z = mean + eps * exp(0.5 * log_var)   (exp -> EUP, overlaps MXU work)
    z = mean + eps_ref[...] * jnp.exp(logvar * 0.5)
    mv_ref[...] = mv
    z_ref[...] = z


def node_encoder_forward(feat, neighbor_feat, params, eps, *, tile_m=256):
    """feat, neighbor_feat: [N, feat_dim]; eps: [N, latent_dim].

    Returns (z, mean, log_var), each [N, latent_dim] f32.
    """
    N, feat_dim = feat.shape
    hidden_dim = params["w1"].shape[1]
    latent_dim = params["wm"].shape[1]

    # --- weight prep done once in the wrapper (cheap layout plumbing) ------
    w3a = params["w3"][:hidden_dim]          # [hidden, reparam]
    w3b = params["w3"][hidden_dim:]          # [hidden, reparam]
    wmv = jnp.concatenate([params["wm"], params["wv"]], axis=1)   # [reparam, 2*latent]
    bmv = jnp.concatenate([params["bm"], params["bv"]], axis=1)   # [1, 2*latent]

    # --- tile the node axis; pad to a multiple of tile_m -------------------
    tile_m = min(tile_m, pl.cdiv(N, 8) * 8)  # keep tile a multiple of 8
    n_pad = pl.cdiv(N, tile_m) * tile_m
    if n_pad != N:
        pad = n_pad - N
        feat = jnp.pad(feat, ((0, pad), (0, 0)))
        neighbor_feat = jnp.pad(neighbor_feat, ((0, pad), (0, 0)))
        eps = jnp.pad(eps, ((0, pad), (0, 0)))
    grid = (n_pad // tile_m,)

    def row_tiled(dim):
        return pl.BlockSpec((tile_m, dim), lambda i: (i, 0))

    def resident(x):
        # whole array, same block every grid step -> DMA'd once, stays in VMEM
        return pl.BlockSpec(x.shape, lambda i: (0, 0))

    inputs = (
        feat, neighbor_feat,
        params["w1"], params["b1"],
        params["w2"], params["b2"],
        w3a, w3b, params["b3"],
        wmv, bmv,
        eps,
    )
    in_specs = [
        row_tiled(feat_dim), row_tiled(feat_dim),
        resident(params["w1"]), resident(params["b1"]),
        resident(params["w2"]), resident(params["b2"]),
        resident(w3a), resident(w3b), resident(params["b3"]),
        resident(wmv), resident(bmv),
        row_tiled(latent_dim),
    ]

    out_shape = (
        jax.ShapeDtypeStruct((n_pad, 2 * latent_dim), jnp.float32),  # mean|log_var slab
        jax.ShapeDtypeStruct((n_pad, latent_dim), jnp.float32),      # z
    )
    out_specs = (
        row_tiled(2 * latent_dim),
        row_tiled(latent_dim),
    )

    mv, z = pl.pallas_call(
        node_encoder_kernel,
        grid=grid,
        out_shape=out_shape,
        in_specs=in_specs,
        out_specs=out_specs,
        compiler_params=pltpu.CompilerParams(
            dimension_semantics=("parallel",),
            vmem_limit_bytes=32 << 20,
        ),
    )(*inputs)

    mean = mv[:N, :latent_dim]
    log_var = mv[:N, latent_dim:]
    z = z[:N]
    return z, mean, log_var


def init_params(key, feat_dim, hidden_dim, reparam_dim, latent_dim):
    """PyTorch-style uniform(-1/sqrt(fan_in), 1/sqrt(fan_in)) init."""
    def linear(k, fan_in, fan_out):
        kw, kb = jax.random.split(k)
        bound = 1.0 / jnp.sqrt(float(fan_in))
        w = jax.random.uniform(kw, (fan_in, fan_out), jnp.float32, -bound, bound)
        b = jax.random.uniform(kb, (1, fan_out), jnp.float32, -bound, bound)
        return w, b

    k1, k2, k3, k4, k5 = jax.random.split(key, 5)
    w1, b1 = linear(k1, feat_dim, hidden_dim)          # feat_encode
    w2, b2 = linear(k2, feat_dim, hidden_dim)          # neighbor_encode
    w3, b3 = linear(k3, hidden_dim * 2, reparam_dim)   # latent_encode
    wm, bm = linear(k4, reparam_dim, latent_dim)       # mean
    wv, bv = linear(k5, reparam_dim, latent_dim)       # log_var
    return dict(w1=w1, b1=b1, w2=w2, b2=b2, w3=w3, b3=b3,
                wm=wm, bm=bm, wv=wv, bv=bv)


def reference_forward(feat, neighbor_feat, p, eps):
    h1 = jax.nn.relu(feat @ p["w1"] + p["b1"])
    h2 = jax.nn.relu(neighbor_feat @ p["w2"] + p["b2"])
    h3 = jax.nn.relu(jnp.concatenate([h1, h2], axis=1) @ p["w3"] + p["b3"])
    mean = h3 @ p["wm"] + p["bm"]
    logvar = h3 @ p["wv"] + p["bv"]
    z = mean + eps * jnp.exp(0.5 * logvar)
    return z, mean, logvar


if __name__ == "__main__":
    # module default dims, small batch of nodes (not a multiple of the tile
    # size to exercise the padding path; 3 grid steps with tile_m=128)
    feat_dim, hidden_dim, reparam_dim, latent_dim = 512, 256, 128, 64
    N = 300

    key = jax.random.PRNGKey(0)
    k_feat, k_nbr, k_eps, k_param = jax.random.split(key, 4)

    feat = jax.random.normal(k_feat, (N, feat_dim), jnp.float32)
    neighbor_feat = jax.random.normal(k_nbr, (N, feat_dim), jnp.float32)
    # eps ~ N(0,1), generated outside the kernel (matches torch.randn_like)
    eps = jax.random.normal(k_eps, (N, latent_dim), jnp.float32)
    params = init_params(k_param, feat_dim, hidden_dim, reparam_dim, latent_dim)

    fwd = jax.jit(functools.partial(node_encoder_forward, tile_m=128))
    z, mean, log_var = fwd(feat, neighbor_feat, params, eps)
    jax.block_until_ready((z, mean, log_var))

    z_ref, mean_ref, logvar_ref = reference_forward(feat, neighbor_feat, params, eps)
    assert z.shape == (N, latent_dim) and mean.shape == (N, latent_dim)
    assert jnp.allclose(mean, mean_ref, atol=1e-4, rtol=1e-4)
    assert jnp.allclose(log_var, logvar_ref, atol=1e-4, rtol=1e-4)
    assert jnp.allclose(z, z_ref, atol=1e-4, rtol=1e-4)

    print("KERNEL_OK")
</pallas_src>

<mosaic_0001>
module attributes {stable_mosaic.version = 11 : i64} {
  func.func @node_encoder_kernel(%arg0: i32, %arg1: memref<128x512xf32, #tpu.memory_space<vmem>>, %arg2: memref<128x512xf32, #tpu.memory_space<vmem>>, %arg3: memref<512x256xf32, #tpu.memory_space<vmem>>, %arg4: memref<1x256xf32, #tpu.memory_space<vmem>>, %arg5: memref<512x256xf32, #tpu.memory_space<vmem>>, %arg6: memref<1x256xf32, #tpu.memory_space<vmem>>, %arg7: memref<256x128xf32, #tpu.memory_space<vmem>>, %arg8: memref<256x128xf32, #tpu.memory_space<vmem>>, %arg9: memref<1x128xf32, #tpu.memory_space<vmem>>, %arg10: memref<128x128xf32, #tpu.memory_space<vmem>>, %arg11: memref<1x128xf32, #tpu.memory_space<vmem>>, %arg12: memref<128x64xf32, #tpu.memory_space<vmem>>, %arg13: memref<128x128xf32, #tpu.memory_space<vmem>>, %arg14: memref<128x64xf32, #tpu.memory_space<vmem>>) attributes {dimension_semantics = [#tpu.dimension_semantics<parallel>], iteration_bounds = array<i64: 3>, scalar_prefetch = 0 : i64, scratch_operands = 0 : i64, tpu.core_type = #tpu.core_type<tc>, window_params = [{transform_indices = @transform_0, window_bounds = array<i64: 128, 512>}, {transform_indices = @transform_1, window_bounds = array<i64: 128, 512>}, {pipeline_mode = #tpu.pipeline_mode<synchronous>, transform_indices = @transform_2, window_bounds = array<i64: 512, 256>}, {pipeline_mode = #tpu.pipeline_mode<synchronous>, transform_indices = @transform_3, window_bounds = array<i64: 1, 256>}, {pipeline_mode = #tpu.pipeline_mode<synchronous>, transform_indices = @transform_4, window_bounds = array<i64: 512, 256>}, {pipeline_mode = #tpu.pipeline_mode<synchronous>, transform_indices = @transform_5, window_bounds = array<i64: 1, 256>}, {pipeline_mode = #tpu.pipeline_mode<synchronous>, transform_indices = @transform_6, window_bounds = array<i64: 256, 128>}, {pipeline_mode = #tpu.pipeline_mode<synchronous>, transform_indices = @transform_7, window_bounds = array<i64: 256, 128>}, {pipeline_mode = #tpu.pipeline_mode<synchronous>, transform_indices = @transform_8, window_bounds = array<i64: 1, 128>}, {pipeline_mode = #tpu.pipeline_mode<synchronous>, transform_indices = @transform_9, window_bounds = array<i64: 128, 128>}, {pipeline_mode = #tpu.pipeline_mode<synchronous>, transform_indices = @transform_10, window_bounds = array<i64: 1, 128>}, {transform_indices = @transform_11, window_bounds = array<i64: 128, 64>}, {transform_indices = @transform_12, window_bounds = array<i64: 128, 128>}, {transform_indices = @transform_13, window_bounds = array<i64: 128, 64>}]} {
    %c0 = arith.constant 0 : index
    %c0_0 = arith.constant 0 : index
    %0 = vector.load %arg1[%c0, %c0_0] : memref<128x512xf32, #tpu.memory_space<vmem>>, vector<128x512xf32>
    %c0_1 = arith.constant 0 : index
    %c0_2 = arith.constant 0 : index
    %1 = vector.load %arg3[%c0_1, %c0_2] : memref<512x256xf32, #tpu.memory_space<vmem>>, vector<512x256xf32>
    %cst = arith.constant dense<0.000000e+00> : vector<128x256xf32>
    %2 = tpu.matmul %0, %1, %cst {dimension_numbers = #tpu.dot_dimension_numbers<[1], [0], [0], [1], [0, 0, 1, 1], [], []>} : vector<128x512xf32>, vector<512x256xf32>, vector<128x256xf32> -> vector<128x256xf32>
    %c0_3 = arith.constant 0 : index
    %c0_4 = arith.constant 0 : index
    %3 = vector.load %arg4[%c0_3, %c0_4] : memref<1x256xf32, #tpu.memory_space<vmem>>, vector<1x256xf32>
    %4 = vector.broadcast %3 : vector<1x256xf32> to vector<128x256xf32>
    %5 = arith.addf %2, %4 : vector<128x256xf32>
    %cst_5 = arith.constant 0.000000e+00 : f32
    %6 = vector.broadcast %cst_5 : f32 to vector<128x256xf32>
    %7 = arith.maximumf %5, %6 : vector<128x256xf32>
    %c0_6 = arith.constant 0 : index
    %c0_7 = arith.constant 0 : index
    %8 = vector.load %arg2[%c0_6, %c0_7] : memref<128x512xf32, #tpu.memory_space<vmem>>, vector<128x512xf32>
    %c0_8 = arith.constant 0 : index
    %c0_9 = arith.constant 0 : index
    %9 = vector.load %arg5[%c0_8, %c0_9] : memref<512x256xf32, #tpu.memory_space<vmem>>, vector<512x256xf32>
    %cst_10 = arith.constant dense<0.000000e+00> : vector<128x256xf32>
    %10 = tpu.matmul %8, %9, %cst_10 {dimension_numbers = #tpu.dot_dimension_numbers<[1], [0], [0], [1], [0, 0, 1, 1], [], []>} : vector<128x512xf32>, vector<512x256xf32>, vector<128x256xf32> -> vector<128x256xf32>
    %c0_11 = arith.constant 0 : index
    %c0_12 = arith.constant 0 : index
    %11 = vector.load %arg6[%c0_11, %c0_12] : memref<1x256xf32, #tpu.memory_space<vmem>>, vector<1x256xf32>
    %12 = vector.broadcast %11 : vector<1x256xf32> to vector<128x256xf32>
    %13 = arith.addf %10, %12 : vector<128x256xf32>
    %cst_13 = arith.constant 0.000000e+00 : f32
    %14 = vector.broadcast %cst_13 : f32 to vector<128x256xf32>
    %15 = arith.maximumf %13, %14 : vector<128x256xf32>
    %c0_14 = arith.constant 0 : index
    %c0_15 = arith.constant 0 : index
    %16 = vector.load %arg7[%c0_14, %c0_15] : memref<256x128xf32, #tpu.memory_space<vmem>>, vector<256x128xf32>
    %cst_16 = arith.constant dense<0.000000e+00> : vector<128x128xf32>
    %17 = tpu.matmul %7, %16, %cst_16 {dimension_numbers = #tpu.dot_dimension_numbers<[1], [0], [0], [1], [0, 0, 1, 1], [], []>} : vector<128x256xf32>, vector<256x128xf32>, vector<128x128xf32> -> vector<128x128xf32>
    %c0_17 = arith.constant 0 : index
    %c0_18 = arith.constant 0 : index
    %18 = vector.load %arg8[%c0_17, %c0_18] : memref<256x128xf32, #tpu.memory_space<vmem>>, vector<256x128xf32>
    %cst_19 = arith.constant dense<0.000000e+00> : vector<128x128xf32>
    %19 = tpu.matmul %15, %18, %cst_19 {dimension_numbers = #tpu.dot_dimension_numbers<[1], [0], [0], [1], [0, 0, 1, 1], [], []>} : vector<128x256xf32>, vector<256x128xf32>, vector<128x128xf32> -> vector<128x128xf32>
    %20 = arith.addf %17, %19 : vector<128x128xf32>
    %c0_20 = arith.constant 0 : index
    %c0_21 = arith.constant 0 : index
    %21 = vector.load %arg9[%c0_20, %c0_21] : memref<1x128xf32, #tpu.memory_space<vmem>>, vector<1x128xf32>
    %22 = vector.broadcast %21 : vector<1x128xf32> to vector<128x128xf32>
    %23 = arith.addf %20, %22 : vector<128x128xf32>
    %cst_22 = arith.constant 0.000000e+00 : f32
    %24 = vector.broadcast %cst_22 : f32 to vector<128x128xf32>
    %25 = arith.maximumf %23, %24 : vector<128x128xf32>
    %c0_23 = arith.constant 0 : index
    %c0_24 = arith.constant 0 : index
    %26 = vector.load %arg10[%c0_23, %c0_24] : memref<128x128xf32, #tpu.memory_space<vmem>>, vector<128x128xf32>
    %cst_25 = arith.constant dense<0.000000e+00> : vector<128x128xf32>
    %27 = tpu.matmul %25, %26, %cst_25 {dimension_numbers = #tpu.dot_dimension_numbers<[1], [0], [0], [1], [0, 0, 1, 1], [], []>} : vector<128x128xf32>, vector<128x128xf32>, vector<128x128xf32> -> vector<128x128xf32>
    %c0_26 = arith.constant 0 : index
    %c0_27 = arith.constant 0 : index
    %28 = vector.load %arg11[%c0_26, %c0_27] : memref<1x128xf32, #tpu.memory_space<vmem>>, vector<1x128xf32>
    %29 = vector.broadcast %28 : vector<1x128xf32> to vector<128x128xf32>
    %30 = arith.addf %27, %29 : vector<128x128xf32>
    %31 = vector.extract_strided_slice %30 {offsets = [0, 0], sizes = [128, 64], strides = [1, 1]} : vector<128x128xf32> to vector<128x64xf32>
    %32 = vector.extract_strided_slice %30 {offsets = [0, 64], sizes = [128, 64], strides = [1, 1]} : vector<128x128xf32> to vector<128x64xf32>
    %c0_28 = arith.constant 0 : index
    %c0_29 = arith.constant 0 : index
    %33 = vector.load %arg12[%c0_28, %c0_29] : memref<128x64xf32, #tpu.memory_space<vmem>>, vector<128x64xf32>
    %cst_30 = arith.constant 5.000000e-01 : f32
    %34 = vector.broadcast %cst_30 : f32 to vector<128x64xf32>
    %35 = arith.mulf %32, %34 : vector<128x64xf32>
    %36 = math.exp %35 : vector<128x64xf32>
    %37 = arith.mulf %33, %36 : vector<128x64xf32>
    %38 = arith.addf %31, %37 : vector<128x64xf32>
    %c0_31 = arith.constant 0 : index
    %c0_32 = arith.constant 0 : index
    %39 = vector.load %arg13[%c0_31, %c0_32] : memref<128x128xf32, #tpu.memory_space<vmem>>, vector<128x128xf32>
    tpu.vector_store %arg13[%c0_31, %c0_32], %30 {strides = array<i32>} : memref<128x128xf32, #tpu.memory_space<vmem>>, vector<128x128xf32>,
    %c0_33 = arith.constant 0 : index
    %c0_34 = arith.constant 0 : index
    %40 = vector.load %arg14[%c0_33, %c0_34] : memref<128x64xf32, #tpu.memory_space<vmem>>, vector<128x64xf32>
    tpu.vector_store %arg14[%c0_33, %c0_34], %38 {strides = array<i32>} : memref<128x64xf32, #tpu.memory_space<vmem>>, vector<128x64xf32>,
    return
  }
  func.func @transform_0(%arg0: i32) -> (i32, i32) {
    %c0_i32 = arith.constant 0 : i32
    %c0_i32_0 = arith.constant 0 : i32
    return %arg0, %c0_i32 : i32, i32
  }
  func.func @transform_1(%arg0: i32) -> (i32, i32) {
    %c0_i32 = arith.constant 0 : i32
    %c0_i32_0 = arith.constant 0 : i32
    return %arg0, %c0_i32 : i32, i32
  }
  func.func @transform_2(%arg0: i32) -> (i32, i32) {
    %c0_i32 = arith.constant 0 : i32
    %c0_i32_0 = arith.constant 0 : i32
    %c0_i32_1 = arith.constant 0 : i32
    return %c0_i32, %c0_i32_0 : i32, i32
  }
  func.func @transform_3(%arg0: i32) -> (i32, i32) {
    %c0_i32 = arith.constant 0 : i32
    %c0_i32_0 = arith.constant 0 : i32
    %c0_i32_1 = arith.constant 0 : i32
    return %c0_i32, %c0_i32_0 : i32, i32
  }
  func.func @transform_4(%arg0: i32) -> (i32, i32) {
    %c0_i32 = arith.constant 0 : i32
    %c0_i32_0 = arith.constant 0 : i32
    %c0_i32_1 = arith.constant 0 : i32
    return %c0_i32, %c0_i32_0 : i32, i32
  }
  func.func @transform_5(%arg0: i32) -> (i32, i32) {
    %c0_i32 = arith.constant 0 : i32
    %c0_i32_0 = arith.constant 0 : i32
    %c0_i32_1 = arith.constant 0 : i32
    return %c0_i32, %c0_i32_0 : i32, i32
  }
  func.func @transform_6(%arg0: i32) -> (i32, i32) {
    %c0_i32 = arith.constant 0 : i32
    %c0_i32_0 = arith.constant 0 : i32
    %c0_i32_1 = arith.constant 0 : i32
    return %c0_i32, %c0_i32_0 : i32, i32
  }
  func.func @transform_7(%arg0: i32) -> (i32, i32) {
    %c0_i32 = arith.constant 0 : i32
    %c0_i32_0 = arith.constant 0 : i32
    %c0_i32_1 = arith.constant 0 : i32
    return %c0_i32, %c0_i32_0 : i32, i32
  }
  func.func @transform_8(%arg0: i32) -> (i32, i32) {
    %c0_i32 = arith.constant 0 : i32
    %c0_i32_0 = arith.constant 0 : i32
    %c0_i32_1 = arith.constant 0 : i32
    return %c0_i32, %c0_i32_0 : i32, i32
  }
  func.func @transform_9(%arg0: i32) -> (i32, i32) {
    %c0_i32 = arith.constant 0 : i32
    %c0_i32_0 = arith.constant 0 : i32
    %c0_i32_1 = arith.constant 0 : i32
    return %c0_i32, %c0_i32_0 : i32, i32
  }
  func.func @transform_10(%arg0: i32) -> (i32, i32) {
    %c0_i32 = arith.constant 0 : i32
    %c0_i32_0 = arith.constant 0 : i32
    %c0_i32_1 = arith.constant 0 : i32
    return %c0_i32, %c0_i32_0 : i32, i32
  }
  func.func @transform_11(%arg0: i32) -> (i32, i32) {
    %c0_i32 = arith.constant 0 : i32
    %c0_i32_0 = arith.constant 0 : i32
    return %arg0, %c0_i32 : i32, i32
  }
  func.func @transform_12(%arg0: i32) -> (i32, i32) {
    %c0_i32 = arith.constant 0 : i32
    %c0_i32_0 = arith.constant 0 : i32
    return %arg0, %c0_i32 : i32, i32
  }
  func.func @transform_13(%arg0: i32) -> (i32, i32) {
    %c0_i32 = arith.constant 0 : i32
    %c0_i32_0 = arith.constant 0 : i32
    return %arg0, %c0_i32 : i32, i32
  }
}

</mosaic_0001>

<llo_original>
// kernel: node_encoder_forward.1
$region0: #{node_encoder_forward.1}
  #allocation0 [shape = 'u32[]', space=smem, size = 0x4, offset = 0x4, fixed_abs, tag = 'smem constant byte address 0x4 - core index']
  #allocation1 [shape = 'u32[144,128]{1,0:T(1,128)}', space=vmem, size = 0x12000, scoped, tag = 'internal scratch']
  %s0 = inlined_call_operand.vmem [shape: f32[384,512], index: 0, kind: input, shape index: {}]
  %s1 = inlined_call_operand.vmem [shape: f32[384,512], index: 1, kind: input, shape index: {}]
  %s2 = inlined_call_operand.vmem [shape: f32[512,256], index: 2, kind: input, shape index: {}]
  %s3 = inlined_call_operand.vmem [shape: f32[1,256], index: 3, kind: input, shape index: {}]
  %s4 = inlined_call_operand.vmem [shape: f32[512,256], index: 4, kind: input, shape index: {}]
  %s5 = inlined_call_operand.vmem [shape: f32[1,256], index: 5, kind: input, shape index: {}]
  %s6 = inlined_call_operand.vmem [shape: f32[256,128], index: 6, kind: input, shape index: {}]
  %s7 = inlined_call_operand.vmem [shape: f32[256,128], index: 7, kind: input, shape index: {}]
  %s8 = inlined_call_operand.vmem [shape: f32[1,128], index: 8, kind: input, shape index: {}]
  %s9 = inlined_call_operand.vmem [shape: f32[128,128], index: 9, kind: input, shape index: {}]
  %s10 = inlined_call_operand.vmem [shape: f32[1,128], index: 10, kind: input, shape index: {}]
  %s11 = inlined_call_operand.vmem [shape: f32[384,64], index: 11, kind: input, shape index: {}]
  %s12 = inlined_call_operand.vmem [shape: f32[384,128], index: 12, kind: output, shape index: {0}]
  %s13 = inlined_call_operand.vmem [shape: f32[384,64], index: 13, kind: output, shape index: {1}]
  %14 = xla_tuple %s12, %s13
  %s15 = sld [smem:[#allocation0]]
  $region89: #{node_encoder_forward.1} parent=0
    _
  %s17 = ssub.s32 1, %s15
  %s18 = scalar_select 0, %s17, %s15
  loop: start=0, step=1, limit=5
  $region2: #{node_encoder_forward.1} parent=0 // loop_pre_header
    _
  $region3: #{node_encoder_forward.1} parent=0 // loop_header
    %s20 = sphi 0, %s24
    %p21 = scmp.ge.s32.totalorder %s20, 5
    %s30 = sphi 0, %s32
    %s33 = sphi 0, %s30
    %s34 = sphi 0, %s33
    %s50 = sphi 0, %s34
    %s56 = sphi 0, %s58
    %s59 = sphi 0, %s56
    %s60 = sphi 0, %s59
    %s76 = sphi 0, %s60
    %s80 = sphi 0, %s80
    %s82 = sphi 0, %s80
    %s83 = sphi 0, %s82
    %s97 = sphi 0, %s83
    %s101 = sphi 0, %s101
    %s103 = sphi 0, %s101
    %s104 = sphi 0, %s103
    %s118 = sphi 0, %s104
    %s122 = sphi 0, %s122
    %s124 = sphi 0, %s122
    %s125 = sphi 0, %s124
    %s139 = sphi 0, %s125
    %s143 = sphi 0, %s143
    %s145 = sphi 0, %s143
    %s146 = sphi 0, %s145
    %s160 = sphi 0, %s146
    %s164 = sphi 0, %s164
    %s166 = sphi 0, %s164
    %s167 = sphi 0, %s166
    %s181 = sphi 0, %s167
    %s185 = sphi 0, %s185
    %s187 = sphi 0, %s185
    %s188 = sphi 0, %s187
    %s202 = sphi 0, %s188
    %s206 = sphi 0, %s206
    %s208 = sphi 0, %s206
    %s209 = sphi 0, %s208
    %s223 = sphi 0, %s209
    %s227 = sphi 0, %s227
    %s229 = sphi 0, %s227
    %s230 = sphi 0, %s229
    %s244 = sphi 0, %s230
    %s248 = sphi 0, %s248
    %s250 = sphi 0, %s248
    %s251 = sphi 0, %s250
    %s265 = sphi 0, %s251
    %s271 = sphi 0, %s273
    %s274 = sphi 0, %s271
    %s275 = sphi 0, %s274
    %s291 = sphi 0, %s275
    %s297 = sphi 0, %s299
    %s300 = sphi 0, %s297
    %s301 = sphi 0, %s300
    %s317 = sphi 0, %s301
    %s323 = sphi 0, %s325
    %s326 = sphi 0, %s323
    %s327 = sphi 0, %s326
    %s343 = sphi 0, %s327
  $region4: #{node_encoder_forward.1} parent=0 // loop_header_branch
    %23 = sbr.rel (%p21) target = $region8
  $region5: #{node_encoder_forward.1} parent=0 // loop_body
    %s25 = ssub.s32 %s20, 1
    %s26 = ssub.s32 %s20, 2
    %s27 = sadd.s32 %s20, 1
    %s28 = ssub.s32 %s20, %s27
    %p29 = scmp.eq.s32.totalorder %s28, 0
    %s31 = sadd.s32 %s30, 1
    %s32 = scalar_select %p29, %s30, %s31
    %p35 = pneg %p29
    %p36 = scmp.eq.s32.totalorder %s20, 2
    %p37 = por %p35, %p36
    %p38 = scmp.ne.s32.totalorder %s30, %s33
    %p39 = scmp.eq.s32.totalorder %s20, 0
    %p40 = por %p38, %p39
    %p41 = scmp.ne.s32.totalorder %s30, %s33
    %p42 = scmp.eq.s32.totalorder %s25, 2
    %p43 = por %p41, %p42
    %p44 = scmp.ne.s32.totalorder %s33, %s34
    %p45 = scmp.eq.s32.totalorder %s25, 0
    %p46 = por %p44, %p45
    %p47 = scmp.ne.s32.totalorder %s33, %s34
    %p48 = scmp.eq.s32.totalorder %s26, 2
    %p49 = por %p47, %p48
    %p51 = scmp.ne.s32.totalorder %s34, %s50
    %p52 = scmp.eq.s32.totalorder %s26, 0
    %p53 = por %p51, %p52
    %s54 = ssub.s32 %s20, %s27
    %p55 = scmp.eq.s32.totalorder %s54, 0
    %s57 = sadd.s32 %s56, 1
    %s58 = scalar_select %p55, %s56, %s57
    %p61 = pneg %p55
    %p62 = scmp.eq.s32.totalorder %s20, 2
    %p63 = por %p61, %p62
    %p64 = scmp.ne.s32.totalorder %s56, %s59
    %p65 = scmp.eq.s32.totalorder %s20, 0
    %p66 = por %p64, %p65
    %p67 = scmp.ne.s32.totalorder %s56, %s59
    %p68 = scmp.eq.s32.totalorder %s25, 2
    %p69 = por %p67, %p68
    %p70 = scmp.ne.s32.totalorder %s59, %s60
    %p71 = scmp.eq.s32.totalorder %s25, 0
    %p72 = por %p70, %p71
    %p73 = scmp.ne.s32.totalorder %s59, %s60
    %p74 = scmp.eq.s32.totalorder %s26, 2
    %p75 = por %p73, %p74
    %p77 = scmp.ne.s32.totalorder %s60, %s76
    %p78 = scmp.eq.s32.totalorder %s26, 0
    %p79 = por %p77, %p78
    %s81 = sadd.s32 %s80, 1
    %p84 = scmp.eq.s32.totalorder %s20, 2
    %p85 = scmp.ne.s32.totalorder %s80, %s82
    %p86 = scmp.eq.s32.totalorder %s20, 0
    %p87 = por %p85, %p86
    %p88 = scmp.ne.s32.totalorder %s80, %s82
    %p89 = scmp.eq.s32.totalorder %s25, 2
    %p90 = por %p88, %p89
    %p91 = scmp.ne.s32.totalorder %s82, %s83
    %p92 = scmp.eq.s32.totalorder %s25, 0
    %p93 = por %p91, %p92
    %p94 = scmp.ne.s32.totalorder %s82, %s83
    %p95 = scmp.eq.s32.totalorder %s26, 2
    %p96 = por %p94, %p95
    %p98 = scmp.ne.s32.totalorder %s83, %s97
    %p99 = scmp.eq.s32.totalorder %s26, 0
    %p100 = por %p98, %p99
    %s102 = sadd.s32 %s101, 1
    %p105 = scmp.eq.s32.totalorder %s20, 2
    %p106 = scmp.ne.s32.totalorder %s101, %s103
    %p107 = scmp.eq.s32.totalorder %s20, 0
    %p108 = por %p106, %p107
    %p109 = scmp.ne.s32.totalorder %s101, %s103
    %p110 = scmp.eq.s32.totalorder %s25, 2
    %p111 = por %p109, %p110
    %p112 = scmp.ne.s32.totalorder %s103, %s104
    %p113 = scmp.eq.s32.totalorder %s25, 0
    %p114 = por %p112, %p113
    %p115 = scmp.ne.s32.totalorder %s103, %s104
    %p116 = scmp.eq.s32.totalorder %s26, 2
    %p117 = por %p115, %p116
    %p119 = scmp.ne.s32.totalorder %s104, %s118
    %p120 = scmp.eq.s32.totalorder %s26, 0
    %p121 = por %p119, %p120
    %s123 = sadd.s32 %s122, 1
    %p126 = scmp.eq.s32.totalorder %s20, 2
    %p127 = scmp.ne.s32.totalorder %s122, %s124
    %p128 = scmp.eq.s32.totalorder %s20, 0
    %p129 = por %p127, %p128
    %p130 = scmp.ne.s32.totalorder %s122, %s124
    %p131 = scmp.eq.s32.totalorder %s25, 2
    %p132 = por %p130, %p131
    %p133 = scmp.ne.s32.totalorder %s124, %s125
    %p134 = scmp.eq.s32.totalorder %s25, 0
    %p135 = por %p133, %p134
    %p136 = scmp.ne.s32.totalorder %s124, %s125
    %p137 = scmp.eq.s32.totalorder %s26, 2
    %p138 = por %p136, %p137
    %p140 = scmp.ne.s32.totalorder %s125, %s139
    %p141 = scmp.eq.s32.totalorder %s26, 0
    %p142 = por %p140, %p141
    %s144 = sadd.s32 %s143, 1
    %p147 = scmp.eq.s32.totalorder %s20, 2
    %p148 = scmp.ne.s32.totalorder %s143, %s145
    %p149 = scmp.eq.s32.totalorder %s20, 0
    %p150 = por %p148, %p149
    %p151 = scmp.ne.s32.totalorder %s143, %s145
    %p152 = scmp.eq.s32.totalorder %s25, 2
    %p153 = por %p151, %p152
    %p154 = scmp.ne.s32.totalorder %s145, %s146
    %p155 = scmp.eq.s32.totalorder %s25, 0
    %p156 = por %p154, %p155
    %p157 = scmp.ne.s32.totalorder %s145, %s146
    %p158 = scmp.eq.s32.totalorder %s26, 2
    %p159 = por %p157, %p158
    %p161 = scmp.ne.s32.totalorder %s146, %s160
    %p162 = scmp.eq.s32.totalorder %s26, 0
    %p163 = por %p161, %p162
    %s165 = sadd.s32 %s164, 1
    %p168 = scmp.eq.s32.totalorder %s20, 2
    %p169 = scmp.ne.s32.totalorder %s164, %s166
    %p170 = scmp.eq.s32.totalorder %s20, 0
    %p171 = por %p169, %p170
    %p172 = scmp.ne.s32.totalorder %s164, %s166
    %p173 = scmp.eq.s32.totalorder %s25, 2
    %p174 = por %p172, %p173
    %p175 = scmp.ne.s32.totalorder %s166, %s167
    %p176 = scmp.eq.s32.totalorder %s25, 0
    %p177 = por %p175, %p176
    %p178 = scmp.ne.s32.totalorder %s166, %s167
    %p179 = scmp.eq.s32.totalorder %s26, 2
    %p180 = por %p178, %p179
    %p182 = scmp.ne.s32.totalorder %s167, %s181
    %p183 = scmp.eq.s32.totalorder %s26, 0
    %p184 = por %p182, %p183
    %s186 = sadd.s32 %s185, 1
    %p189 = scmp.eq.s32.totalorder %s20, 2
    %p190 = scmp.ne.s32.totalorder %s185, %s187
    %p191 = scmp.eq.s32.totalorder %s20, 0
    %p192 = por %p190, %p191
    %p193 = scmp.ne.s32.totalorder %s185, %s187
    %p194 = scmp.eq.s32.totalorder %s25, 2
    %p195 = por %p193, %p194
    %p196 = scmp.ne.s32.totalorder %s187, %s188
    %p197 = scmp.eq.s32.totalorder %s25, 0
    %p198 = por %p196, %p197
    %p199 = scmp.ne.s32.totalorder %s187, %s188
    %p200 = scmp.eq.s32.totalorder %s26, 2
    %p201 = por %p199, %p200
    %p203 = scmp.ne.s32.totalorder %s188, %s202
    %p204 = scmp.eq.s32.totalorder %s26, 0
    %p205 = por %p203, %p204
    %s207 = sadd.s32 %s206, 1
    %p210 = scmp.eq.s32.totalorder %s20, 2
    %p211 = scmp.ne.s32.totalorder %s206, %s208
    %p212 = scmp.eq.s32.totalorder %s20, 0
    %p213 = por %p211, %p212
    %p214 = scmp.ne.s32.totalorder %s206, %s208
    %p215 = scmp.eq.s32.totalorder %s25, 2
    %p216 = por %p214, %p215
    %p217 = scmp.ne.s32.totalorder %s208, %s209
    %p218 = scmp.eq.s32.totalorder %s25, 0
    %p219 = por %p217, %p218
    %p220 = scmp.ne.s32.totalorder %s208, %s209
    %p221 = scmp.eq.s32.totalorder %s26, 2
    %p222 = por %p220, %p221
    %p224 = scmp.ne.s32.totalorder %s209, %s223
    %p225 = scmp.eq.s32.totalorder %s26, 0
    %p226 = por %p224, %p225
    %s228 = sadd.s32 %s227, 1
    %p231 = scmp.eq.s32.totalorder %s20, 2
    %p232 = scmp.ne.s32.totalorder %s227, %s229
    %p233 = scmp.eq.s32.totalorder %s20, 0
    %p234 = por %p232, %p233
    %p235 = scmp.ne.s32.totalorder %s227, %s229
    %p236 = scmp.eq.s32.totalorder %s25, 2
    %p237 = por %p235, %p236
    %p238 = scmp.ne.s32.totalorder %s229, %s230
    %p239 = scmp.eq.s32.totalorder %s25, 0
    %p240 = por %p238, %p239
    %p241 = scmp.ne.s32.totalorder %s229, %s230
    %p242 = scmp.eq.s32.totalorder %s26, 2
    %p243 = por %p241, %p242
    %p245 = scmp.ne.s32.totalorder %s230, %s244
    %p246 = scmp.eq.s32.totalorder %s26, 0
    %p247 = por %p245, %p246
    %s249 = sadd.s32 %s248, 1
    %p252 = scmp.eq.s32.totalorder %s20, 2
    %p253 = scmp.ne.s32.totalorder %s248, %s250
    %p254 = scmp.eq.s32.totalorder %s20, 0
    %p255 = por %p253, %p254
    %p256 = scmp.ne.s32.totalorder %s248, %s250
    %p257 = scmp.eq.s32.totalorder %s25, 2
    %p258 = por %p256, %p257
    %p259 = scmp.ne.s32.totalorder %s250, %s251
    %p260 = scmp.eq.s32.totalorder %s25, 0
    %p261 = por %p259, %p260
    %p262 = scmp.ne.s32.totalorder %s250, %s251
    %p263 = scmp.eq.s32.totalorder %s26, 2
    %p264 = por %p262, %p263
    %p266 = scmp.ne.s32.totalorder %s251, %s265
    %p267 = scmp.eq.s32.totalorder %s26, 0
    %p268 = por %p266, %p267
    %s269 = ssub.s32 %s20, %s27
    %p270 = scmp.eq.s32.totalorder %s269, 0
    %s272 = sadd.s32 %s271, 1
    %s273 = scalar_select %p270, %s271, %s272
    %p276 = pneg %p270
    %p277 = scmp.eq.s32.totalorder %s20, 2
    %p278 = por %p276, %p277
    %p279 = scmp.ne.s32.totalorder %s271, %s274
    %p280 = scmp.eq.s32.totalorder %s20, 0
    %p281 = por %p279, %p280
    %p282 = scmp.ne.s32.totalorder %s271, %s274
    %p283 = scmp.eq.s32.totalorder %s25, 2
    %p284 = por %p282, %p283
    %p285 = scmp.ne.s32.totalorder %s274, %s275
    %p286 = scmp.eq.s32.totalorder %s25, 0
    %p287 = por %p285, %p286
    %p288 = scmp.ne.s32.totalorder %s274, %s275
    %p289 = scmp.eq.s32.totalorder %s26, 2
    %p290 = por %p288, %p289
    %p292 = scmp.ne.s32.totalorder %s275, %s291
    %p293 = scmp.eq.s32.totalorder %s26, 0
    %p294 = por %p292, %p293
    %s295 = ssub.s32 %s20, %s27
    %p296 = scmp.eq.s32.totalorder %s295, 0
    %s298 = sadd.s32 %s297, 1
    %s299 = scalar_select %p296, %s297, %s298
    %p302 = pneg %p296
    %p303 = scmp.eq.s32.totalorder %s20, 2
    %p304 = por %p302, %p303
    %p305 = scmp.ne.s32.totalorder %s297, %s300
    %p306 = scmp.eq.s32.totalorder %s20, 0
    %p307 = por %p305, %p306
    %p308 = scmp.ne.s32.totalorder %s297, %s300
    %p309 = scmp.eq.s32.totalorder %s25, 2
    %p310 = por %p308, %p309
    %p311 = scmp.ne.s32.totalorder %s300, %s301
    %p312 = scmp.eq.s32.totalorder %s25, 0
    %p313 = por %p311, %p312
    %p314 = scmp.ne.s32.totalorder %s300, %s301
    %p315 = scmp.eq.s32.totalorder %s26, 2
    %p316 = por %p314, %p315
    %p318 = scmp.ne.s32.totalorder %s301, %s317
    %p319 = scmp.eq.s32.totalorder %s26, 0
    %p320 = por %p318, %p319
    %s321 = ssub.s32 %s20, %s27
    %p322 = scmp.eq.s32.totalorder %s321, 0
    %s324 = sadd.s32 %s323, 1
    %s325 = scalar_select %p322, %s323, %s324
    %p328 = pneg %p322
    %p329 = scmp.eq.s32.totalorder %s20, 2
    %p330 = por %p328, %p329
    %p331 = scmp.ne.s32.totalorder %s323, %s326
    %p332 = scmp.eq.s32.totalorder %s20, 0
    %p333 = por %p331, %p332
    %p334 = scmp.ne.s32.totalorder %s323, %s326
    %p335 = scmp.eq.s32.totalorder %s25, 2
    %p336 = por %p334, %p335
    %p337 = scmp.ne.s32.totalorder %s326, %s327
    %p338 = scmp.eq.s32.totalorder %s25, 0
    %p339 = por %p337, %p338
    %p340 = scmp.ne.s32.totalorder %s326, %s327
    %p341 = scmp.eq.s32.totalorder %s26, 2
    %p342 = por %p340, %p341
    %p344 = scmp.ne.s32.totalorder %s327, %s343
    %p345 = scmp.eq.s32.totalorder %s26, 0
    %p346 = por %p344, %p345
    %p347 = scmp.le.s32.totalorder 1, %s20
    %p348 = scmp.lt.s32.totalorder %s20, 4
    %p349 = pnand %p347, %p348
    %p350 = pneg %p349
    // Predicated region
    $region9: #{node_encoder_forward.1} parent=5 // pred_check
      _
    $region10: #{node_encoder_forward.1} parent=5 // pred_check_branch
      %352 = sbr.rel (%p349) target = $region12
    $region11: #{node_encoder_forward.1} parent=5 // pred_region
      %s353 = ssub.s32 %s20, 1
      // Predicated region
      $region13: #{node_encoder_forward.1} parent=11 // pred_check
        %p354 = pneg %p93
      $region14: #{node_encoder_forward.1} parent=11 // pred_check_branch
        %356 = sbr.rel (%p354) target = $region16
      $region15: #{node_encoder_forward.1} parent=11 // pred_region
        _
      $region16: #{node_encoder_forward.1} parent=11 // pred_fallthru
        _
      // Predicated region
      $region17: #{node_encoder_forward.1} parent=11 // pred_check
        %p357 = pneg %p114
      $region18: #{node_encoder_forward.1} parent=11 // pred_check_branch
        %359 = sbr.rel (%p357) target = $region20
      $region19: #{node_encoder_forward.1} parent=11 // pred_region
        _
      $region20: #{node_encoder_forward.1} parent=11 // pred_fallthru
        _
      // Predicated region
      $region21: #{node_encoder_forward.1} parent=11 // pred_check
        %p360 = pneg %p135
      $region22: #{node_encoder_forward.1} parent=11 // pred_check_branch
        %362 = sbr.rel (%p360) target = $region24
      $region23: #{node_encoder_forward.1} parent=11 // pred_region
        _
      $region24: #{node_encoder_forward.1} parent=11 // pred_fallthru
        _
      // Predicated region
      $region25: #{node_encoder_forward.1} parent=11 // pred_check
        %p363 = pneg %p156
      $region26: #{node_encoder_forward.1} parent=11 // pred_check_branch
        %365 = sbr.rel (%p363) target = $region28
      $region27: #{node_encoder_forward.1} parent=11 // pred_region
        _
      $region28: #{node_encoder_forward.1} parent=11 // pred_fallthru
        _
      // Predicated region
      $region29: #{node_encoder_forward.1} parent=11 // pred_check
        %p366 = pneg %p177
      $region30: #{node_encoder_forward.1} parent=11 // pred_check_branch
        %368 = sbr.rel (%p366) target = $region32
      $region31: #{node_encoder_forward.1} parent=11 // pred_region
        _
      $region32: #{node_encoder_forward.1} parent=11 // pred_fallthru
        _
      // Predicated region
      $region33: #{node_encoder_forward.1} parent=11 // pred_check
        %p369 = pneg %p198
      $region34: #{node_encoder_forward.1} parent=11 // pred_check_branch
        %371 = sbr.rel (%p369) target = $region36
      $region35: #{node_encoder_forward.1} parent=11 // pred_region
        _
      $region36: #{node_encoder_forward.1} parent=11 // pred_fallthru
        _
      // Predicated region
      $region37: #{node_encoder_forward.1} parent=11 // pred_check
        %p372 = pneg %p219
      $region38: #{node_encoder_forward.1} parent=11 // pred_check_branch
        %374 = sbr.rel (%p372) target = $region40
      $region39: #{node_encoder_forward.1} parent=11 // pred_region
        _
      $region40: #{node_encoder_forward.1} parent=11 // pred_fallthru
        _
      // Predicated region
      $region41: #{node_encoder_forward.1} parent=11 // pred_check
        %p375 = pneg %p240
      $region42: #{node_encoder_forward.1} parent=11 // pred_check_branch
        %377 = sbr.rel (%p375) target = $region44
      $region43: #{node_encoder_forward.1} parent=11 // pred_region
        _
      $region44: #{node_encoder_forward.1} parent=11 // pred_fallthru
        _
      // Predicated region
      $region45: #{node_encoder_forward.1} parent=11 // pred_check
        %p378 = pneg %p261
      $region46: #{node_encoder_forward.1} parent=11 // pred_check_branch
        %380 = sbr.rel (%p378) target = $region48
      $region47: #{node_encoder_forward.1} parent=11 // pred_region
        _
      $region48: #{node_encoder_forward.1} parent=11 // pred_fallthru
        _
    $region12: #{node_encoder_forward.1} parent=5 // pred_fallthru
      _
    %p381 = scmp.lt.s32.totalorder %s20, 3
    // Predicated region
    $region49: #{node_encoder_forward.1} parent=5 // pred_check
      %p382 = pneg %p381
    $region50: #{node_encoder_forward.1} parent=5 // pred_check_branch
      %384 = sbr.rel (%p382) target = $region52
    $region51: #{node_encoder_forward.1} parent=5 // pred_region
      // Predicated region
      $region53: #{node_encoder_forward.1} parent=51 // pred_check
        %p385 = pneg %p40
      $region54: #{node_encoder_forward.1} parent=51 // pred_check_branch
        %387 = sbr.rel (%p385) target = $region56
      $region55: #{node_encoder_forward.1} parent=51 // pred_region
        %s388 = smul.u32 16, %s20
        %p389 = scmp.lt.s32.totalorder %s388, 47
        %s390 = scalar_select %p389, %s388, 47
        %s391 = smul.addr %s390, 4
        %s392 = smul.addr %s391, 8
        %s393 = scalar_lea.vmem %s0, %s392
        %s394 = smul.u32 16, %s20
      $region56: #{node_encoder_forward.1} parent=51 // pred_fallthru
        _
      // Predicated region
      $region57: #{node_encoder_forward.1} parent=51 // pred_check
        %p395 = pneg %p66
      $region58: #{node_encoder_forward.1} parent=51 // pred_check_branch
        %397 = sbr.rel (%p395) target = $region60
      $region59: #{node_encoder_forward.1} parent=51 // pred_region
        %s398 = smul.u32 16, %s20
        %p399 = scmp.lt.s32.totalorder %s398, 47
        %s400 = scalar_select %p399, %s398, 47
        %s401 = smul.addr %s400, 4
        %s402 = smul.addr %s401, 8
        %s403 = scalar_lea.vmem %s1, %s402
        %s404 = smul.u32 16, %s20
      $region60: #{node_encoder_forward.1} parent=51 // pred_fallthru
        _
      // Predicated region
      $region61: #{node_encoder_forward.1} parent=51 // pred_check
        %p405 = pneg %p281
      $region62: #{node_encoder_forward.1} parent=51 // pred_check_branch
        %407 = sbr.rel (%p405) target = $region64
      $region63: #{node_encoder_forward.1} parent=51 // pred_region
        %s408 = smul.u32 16, %s20
        %p409 = scmp.lt.s32.totalorder %s408, 47
        %s410 = scalar_select %p409, %s408, 47
        %s411 = smul.addr %s410, 8
        %s412 = scalar_lea.vmem %s11, %s411
        %s413 = smul.u32 16, %s20
      $region64: #{node_encoder_forward.1} parent=51 // pred_fallthru
        _
    $region52: #{node_encoder_forward.1} parent=5 // pred_fallthru
      _
    %p414 = scmp.le.s32.totalorder 1, %s20
    %p415 = scmp.lt.s32.totalorder %s20, 4
    %p416 = pnand %p414, %p415
    %p417 = pneg %p416
    // Predicated region
    $region65: #{node_encoder_forward.1} parent=5 // pred_check
      _
    $region66: #{node_encoder_forward.1} parent=5 // pred_check_branch
      %419 = sbr.rel (%p416) target = $region68
    $region67: #{node_encoder_forward.1} parent=5 // pred_region
      %s420 = ssub.s32 %s20, 1
      %s421 = smul.u32 16, %s25
      %p422 = scmp.lt.s32.totalorder %s421, 47
      %s423 = scalar_select %p422, %s421, 47
      %s424 = smul.addr %s423, 4
      %s425 = smul.addr %s424, 8
      %s426 = scalar_lea.vmem %s0, %s425
      %p427 = pneg %p46
      %p428 = pneg %p43
      %s429 = smul.u32 16, %s25
      %p430 = scmp.lt.s32.totalorder %s429, 47
      %s431 = scalar_select %p430, %s429, 47
      %s432 = smul.addr %s431, 4
      %s433 = smul.addr %s432, 8
      %s434 = scalar_lea.vmem %s1, %s433
      %p435 = pneg %p72
      %p436 = pneg %p69
      %p437 = pneg %p93
      %p438 = pneg %p90
      %p439 = pneg %p114
      %p440 = pneg %p111
      %p441 = pneg %p135
      %p442 = pneg %p132
      %p443 = pneg %p156
      %p444 = pneg %p153
      %p445 = pneg %p177
      %p446 = pneg %p174
      %p447 = pneg %p198
      %p448 = pneg %p195
      %p449 = pneg %p219
      %p450 = pneg %p216
      %p451 = pneg %p240
      %p452 = pneg %p237
      %p453 = pneg %p261
      %p454 = pneg %p258
      %s455 = smul.u32 16, %s25
      %p456 = scmp.lt.s32.totalorder %s455, 47
      %s457 = scalar_select %p456, %s455, 47
      %s458 = smul.addr %s457, 8
      %s459 = scalar_lea.vmem %s11, %s458
      %p460 = pneg %p287
      %p461 = pneg %p284
      %p462 = pneg %p313
      %p463 = pneg %p310
      %s464 = smul.u32 16, %s25
      %p465 = scmp.lt.s32.totalorder %s464, 47
      %s466 = scalar_select %p465, %s464, 47
      %s467 = smul.addr %s466, 8
      %s468 = scalar_lea.vmem %s12, %s467
      %p469 = pneg %p339
      %p470 = pneg %p336
      %s471 = smul.u32 16, %s25
      %p472 = scmp.lt.s32.totalorder %s471, 47
      %s473 = scalar_select %p472, %s471, 47
      %s474 = smul.addr %s473, 8
      %s475 = scalar_lea.vmem %s13, %s474
      %s476 = smul.u32 16, %s25
      %p477 = scmp.lt.s32.totalorder %s476, 47
      %s478 = scalar_select %p477, %s476, 47
      %s479 = smul.addr %s478, 4
      %s480 = smul.addr %s479, 8
      %s481 = scalar_lea.vmem %s0, %s480
      %s482 = smul.u32 16, %s25
      %s483 = smul.u32 16, %s25
      %p484 = scmp.lt.s32.totalorder %s483, 47
      %s485 = scalar_select %p484, %s483, 47
      %s486 = smul.addr %s485, 4
      %s487 = smul.addr %s486, 8
      %s488 = scalar_lea.vmem %s1, %s487
      %s489 = smul.u32 16, %s25
      %s490 = smul.u32 16, %s25
      %p491 = scmp.lt.s32.totalorder %s490, 47
      %s492 = scalar_select %p491, %s490, 47
      %s493 = smul.addr %s492, 8
      %s494 = scalar_lea.vmem %s11, %s493
      %s495 = smul.u32 16, %s25
      %s496 = smul.u32 16, %s25
      %p497 = scmp.lt.s32.totalorder %s496, 47
      %s498 = scalar_select %p497, %s496, 47
      %s499 = smul.addr %s498, 8
      %s500 = scalar_lea.vmem %s12, %s499
      %s501 = smul.u32 16, %s25
      %s502 = smul.u32 16, %s25
      %p503 = scmp.lt.s32.totalorder %s502, 47
      %s504 = scalar_select %p503, %s502, 47
      %s505 = smul.addr %s504, 8
      %s506 = scalar_lea.vmem %s13, %s505
      %s507 = smul.u32 16, %s25
      %v508 = vld [vmem:[%s481] sm:$0xff]
      %v509 = vld [vmem:[%s481 + $0x8] sm:$0xff]
      %v510 = vld [vmem:[%s481 + $0x10] sm:$0xff]
      %v511 = vld [vmem:[%s481 + $0x18] sm:$0xff]
      %v512 = vld [vmem:[%s481 + $0x20] sm:$0xff]
      %v513 = vld [vmem:[%s481 + $0x28] sm:$0xff]
      %v514 = vld [vmem:[%s481 + $0x30] sm:$0xff]
      %v515 = vld [vmem:[%s481 + $0x38] sm:$0xff]
      %v516 = vld [vmem:[%s481 + $0x40] sm:$0xff]
      %v517 = vld [vmem:[%s481 + $0x48] sm:$0xff]
      %v518 = vld [vmem:[%s481 + $0x50] sm:$0xff]
      %v519 = vld [vmem:[%s481 + $0x58] sm:$0xff]
      %v520 = vld [vmem:[%s481 + $0x60] sm:$0xff]
      %v521 = vld [vmem:[%s481 + $0x68] sm:$0xff]
      %v522 = vld [vmem:[%s481 + $0x70] sm:$0xff]
      %v523 = vld [vmem:[%s481 + $0x78] sm:$0xff]
      %v524 = vld [vmem:[%s481 + $0x80] sm:$0xff]
      %v525 = vld [vmem:[%s481 + $0x88] sm:$0xff]
      %v526 = vld [vmem:[%s481 + $0x90] sm:$0xff]
      %v527 = vld [vmem:[%s481 + $0x98] sm:$0xff]
      %v528 = vld [vmem:[%s481 + $0xa0] sm:$0xff]
      %v529 = vld [vmem:[%s481 + $0xa8] sm:$0xff]
      %v530 = vld [vmem:[%s481 + $0xb0] sm:$0xff]
      %v531 = vld [vmem:[%s481 + $0xb8] sm:$0xff]
      %v532 = vld [vmem:[%s481 + $0xc0] sm:$0xff]
      %v533 = vld [vmem:[%s481 + $0xc8] sm:$0xff]
      %v534 = vld [vmem:[%s481 + $0xd0] sm:$0xff]
      %v535 = vld [vmem:[%s481 + $0xd8] sm:$0xff]
      %v536 = vld [vmem:[%s481 + $0xe0] sm:$0xff]
      %v537 = vld [vmem:[%s481 + $0xe8] sm:$0xff]
      %v538 = vld [vmem:[%s481 + $0xf0] sm:$0xff]
      %v539 = vld [vmem:[%s481 + $0xf8] sm:$0xff]
      %v540 = vld [vmem:[%s481 + $0x100] sm:$0xff]
      %v541 = vld [vmem:[%s481 + $0x108] sm:$0xff]
      %v542 = vld [vmem:[%s481 + $0x110] sm:$0xff]
      %v543 = vld [vmem:[%s481 + $0x118] sm:$0xff]
      %v544 = vld [vmem:[%s481 + $0x120] sm:$0xff]
      %v545 = vld [vmem:[%s481 + $0x128] sm:$0xff]
      %v546 = vld [vmem:[%s481 + $0x130] sm:$0xff]
      %v547 = vld [vmem:[%s481 + $0x138] sm:$0xff]
      %v548 = vld [vmem:[%s481 + $0x140] sm:$0xff]
      %v549 = vld [vmem:[%s481 + $0x148] sm:$0xff]
      %v550 = vld [vmem:[%s481 + $0x150] sm:$0xff]
      %v551 = vld [vmem:[%s481 + $0x158] sm:$0xff]
      %v552 = vld [vmem:[%s481 + $0x160] sm:$0xff]
      %v553 = vld [vmem:[%s481 + $0x168] sm:$0xff]
      %v554 = vld [vmem:[%s481 + $0x170] sm:$0xff]
      %v555 = vld [vmem:[%s481 + $0x178] sm:$0xff]
      %v556 = vld [vmem:[%s481 + $0x180] sm:$0xff]
      %v557 = vld [vmem:[%s481 + $0x188] sm:$0xff]
      %v558 = vld [vmem:[%s481 + $0x190] sm:$0xff]
      %v559 = vld [vmem:[%s481 + $0x198] sm:$0xff]
      %v560 = vld [vmem:[%s481 + $0x1a0] sm:$0xff]
      %v561 = vld [vmem:[%s481 + $0x1a8] sm:$0xff]
      %v562 = vld [vmem:[%s481 + $0x1b0] sm:$0xff]
      %v563 = vld [vmem:[%s481 + $0x1b8] sm:$0xff]
      %v564 = vld [vmem:[%s481 + $0x1c0] sm:$0xff]
      %v565 = vld [vmem:[%s481 + $0x1c8] sm:$0xff]
      %v566 = vld [vmem:[%s481 + $0x1d0] sm:$0xff]
      %v567 = vld [vmem:[%s481 + $0x1d8] sm:$0xff]
      %v568 = vld [vmem:[%s481 + $0x1e0] sm:$0xff]
      %v569 = vld [vmem:[%s481 + $0x1e8] sm:$0xff]
      %v570 = vld [vmem:[%s481 + $0x1f0] sm:$0xff]
      %v571 = vld [vmem:[%s481 + $0x1f8] sm:$0xff]
      %v572 = vld [vmem:[%s2] sm:$0xff]
      %v573 = vld [vmem:[%s2 + $0x8] sm:$0xff]
      %v574 = vld [vmem:[%s2 + $0x10] sm:$0xff]
      %v575 = vld [vmem:[%s2 + $0x18] sm:$0xff]
      %v576 = vld [vmem:[%s2 + $0x20] sm:$0xff]
      %v577 = vld [vmem:[%s2 + $0x28] sm:$0xff]
      %v578 = vld [vmem:[%s2 + $0x30] sm:$0xff]
      %v579 = vld [vmem:[%s2 + $0x38] sm:$0xff]
      %v580 = vld [vmem:[%s2 + $0x40] sm:$0xff]
      %v581 = vld [vmem:[%s2 + $0x48] sm:$0xff]
      %v582 = vld [vmem:[%s2 + $0x50] sm:$0xff]
      %v583 = vld [vmem:[%s2 + $0x58] sm:$0xff]
      %v584 = vld [vmem:[%s2 + $0x60] sm:$0xff]
      %v585 = vld [vmem:[%s2 + $0x68] sm:$0xff]
      %v586 = vld [vmem:[%s2 + $0x70] sm:$0xff]
      %v587 = vld [vmem:[%s2 + $0x78] sm:$0xff]
      %v588 = vld [vmem:[%s2 + $0x80] sm:$0xff]
      %v589 = vld [vmem:[%s2 + $0x88] sm:$0xff]
      %v590 = vld [vmem:[%s2 + $0x90] sm:$0xff]
      %v591 = vld [vmem:[%s2 + $0x98] sm:$0xff]
      %v592 = vld [vmem:[%s2 + $0xa0] sm:$0xff]
      %v593 = vld [vmem:[%s2 + $0xa8] sm:$0xff]
      %v594 = vld [vmem:[%s2 + $0xb0] sm:$0xff]
      %v595 = vld [vmem:[%s2 + $0xb8] sm:$0xff]
      %v596 = vld [vmem:[%s2 + $0xc0] sm:$0xff]
      %v597 = vld [vmem:[%s2 + $0xc8] sm:$0xff]
      %v598 = vld [vmem:[%s2 + $0xd0] sm:$0xff]
      %v599 = vld [vmem:[%s2 + $0xd8] sm:$0xff]
      %v600 = vld [vmem:[%s2 + $0xe0] sm:$0xff]
      %v601 = vld [vmem:[%s2 + $0xe8] sm:$0xff]
      %v602 = vld [vmem:[%s2 + $0xf0] sm:$0xff]
      %v603 = vld [vmem:[%s2 + $0xf8] sm:$0xff]
      %v604 = vld [vmem:[%s2 + $0x100] sm:$0xff]
      %v605 = vld [vmem:[%s2 + $0x108] sm:$0xff]
      %v606 = vld [vmem:[%s2 + $0x110] sm:$0xff]
      %v607 = vld [vmem:[%s2 + $0x118] sm:$0xff]
      %v608 = vld [vmem:[%s2 + $0x120] sm:$0xff]
      %v609 = vld [vmem:[%s2 + $0x128] sm:$0xff]
      %v610 = vld [vmem:[%s2 + $0x130] sm:$0xff]
      %v611 = vld [vmem:[%s2 + $0x138] sm:$0xff]
      %v612 = vld [vmem:[%s2 + $0x140] sm:$0xff]
      %v613 = vld [vmem:[%s2 + $0x148] sm:$0xff]
      %v614 = vld [vmem:[%s2 + $0x150] sm:$0xff]
      %v615 = vld [vmem:[%s2 + $0x158] sm:$0xff]
      %v616 = vld [vmem:[%s2 + $0x160] sm:$0xff]
      %v617 = vld [vmem:[%s2 + $0x168] sm:$0xff]
      %v618 = vld [vmem:[%s2 + $0x170] sm:$0xff]
      %v619 = vld [vmem:[%s2 + $0x178] sm:$0xff]
      %v620 = vld [vmem:[%s2 + $0x180] sm:$0xff]
      %v621 = vld [vmem:[%s2 + $0x188] sm:$0xff]
      %v622 = vld [vmem:[%s2 + $0x190] sm:$0xff]
      %v623 = vld [vmem:[%s2 + $0x198] sm:$0xff]
      %v624 = vld [vmem:[%s2 + $0x1a0] sm:$0xff]
      %v625 = vld [vmem:[%s2 + $0x1a8] sm:$0xff]
      %v626 = vld [vmem:[%s2 + $0x1b0] sm:$0xff]
      %v627 = vld [vmem:[%s2 + $0x1b8] sm:$0xff]
      %v628 = vld [vmem:[%s2 + $0x1c0] sm:$0xff]
      %v629 = vld [vmem:[%s2 + $0x1c8] sm:$0xff]
      %v630 = vld [vmem:[%s2 + $0x1d0] sm:$0xff]
      %v631 = vld [vmem:[%s2 + $0x1d8] sm:$0xff]
      %v632 = vld [vmem:[%s2 + $0x1e0] sm:$0xff]
      %v633 = vld [vmem:[%s2 + $0x1e8] sm:$0xff]
      %v634 = vld [vmem:[%s2 + $0x1f0] sm:$0xff]
      %v635 = vld [vmem:[%s2 + $0x1f8] sm:$0xff]
      %v636 = vld [vmem:[%s2 + $0x200] sm:$0xff]
      %v637 = vld [vmem:[%s2 + $0x208] sm:$0xff]
      %v638 = vld [vmem:[%s2 + $0x210] sm:$0xff]
      %v639 = vld [vmem:[%s2 + $0x218] sm:$0xff]
      %v640 = vld [vmem:[%s2 + $0x220] sm:$0xff]
      %v641 = vld [vmem:[%s2 + $0x228] sm:$0xff]
      %v642 = vld [vmem:[%s2 + $0x230] sm:$0xff]
      %v643 = vld [vmem:[%s2 + $0x238] sm:$0xff]
      %v644 = vld [vmem:[%s2 + $0x240] sm:$0xff]
      %v645 = vld [vmem:[%s2 + $0x248] sm:$0xff]
      %v646 = vld [vmem:[%s2 + $0x250] sm:$0xff]
      %v647 = vld [vmem:[%s2 + $0x258] sm:$0xff]
      %v648 = vld [vmem:[%s2 + $0x260] sm:$0xff]
      %v649 = vld [vmem:[%s2 + $0x268] sm:$0xff]
      %v650 = vld [vmem:[%s2 + $0x270] sm:$0xff]
      %v651 = vld [vmem:[%s2 + $0x278] sm:$0xff]
      %v652 = vld [vmem:[%s2 + $0x280] sm:$0xff]
      %v653 = vld [vmem:[%s2 + $0x288] sm:$0xff]
      %v654 = vld [vmem:[%s2 + $0x290] sm:$0xff]
      %v655 = vld [vmem:[%s2 + $0x298] sm:$0xff]
      %v656 = vld [vmem:[%s2 + $0x2a0] sm:$0xff]
      %v657 = vld [vmem:[%s2 + $0x2a8] sm:$0xff]
      %v658 = vld [vmem:[%s2 + $0x2b0] sm:$0xff]
      %v659 = vld [vmem:[%s2 + $0x2b8] sm:$0xff]
      %v660 = vld [vmem:[%s2 + $0x2c0] sm:$0xff]
      %v661 = vld [vmem:[%s2 + $0x2c8] sm:$0xff]
      %v662 = vld [vmem:[%s2 + $0x2d0] sm:$0xff]
      %v663 = vld [vmem:[%s2 + $0x2d8] sm:$0xff]
      %v664 = vld [vmem:[%s2 + $0x2e0] sm:$0xff]
      %v665 = vld [vmem:[%s2 + $0x2e8] sm:$0xff]
      %v666 = vld [vmem:[%s2 + $0x2f0] sm:$0xff]
      %v667 = vld [vmem:[%s2 + $0x2f8] sm:$0xff]
      %v668 = vld [vmem:[%s2 + $0x300] sm:$0xff]
      %v669 = vld [vmem:[%s2 + $0x308] sm:$0xff]
      %v670 = vld [vmem:[%s2 + $0x310] sm:$0xff]
      %v671 = vld [vmem:[%s2 + $0x318] sm:$0xff]
      %v672 = vld [vmem:[%s2 + $0x320] sm:$0xff]
      %v673 = vld [vmem:[%s2 + $0x328] sm:$0xff]
      %v674 = vld [vmem:[%s2 + $0x330] sm:$0xff]
      %v675 = vld [vmem:[%s2 + $0x338] sm:$0xff]
      %v676 = vld [vmem:[%s2 + $0x340] sm:$0xff]
      %v677 = vld [vmem:[%s2 + $0x348] sm:$0xff]
      %v678 = vld [vmem:[%s2 + $0x350] sm:$0xff]
      %v679 = vld [vmem:[%s2 + $0x358] sm:$0xff]
      %v680 = vld [vmem:[%s2 + $0x360] sm:$0xff]
      %v681 = vld [vmem:[%s2 + $0x368] sm:$0xff]
      %v682 = vld [vmem:[%s2 + $0x370] sm:$0xff]
      %v683 = vld [vmem:[%s2 + $0x378] sm:$0xff]
      %v684 = vld [vmem:[%s2 + $0x380] sm:$0xff]
      %v685 = vld [vmem:[%s2 + $0x388] sm:$0xff]
      %v686 = vld [vmem:[%s2 + $0x390] sm:$0xff]
      %v687 = vld [vmem:[%s2 + $0x398] sm:$0xff]
      %v688 = vld [vmem:[%s2 + $0x3a0] sm:$0xff]
      %v689 = vld [vmem:[%s2 + $0x3a8] sm:$0xff]
      %v690 = vld [vmem:[%s2 + $0x3b0] sm:$0xff]
      %v691 = vld [vmem:[%s2 + $0x3b8] sm:$0xff]
      %v692 = vld [vmem:[%s2 + $0x3c0] sm:$0xff]
      %v693 = vld [vmem:[%s2 + $0x3c8] sm:$0xff]
      %v694 = vld [vmem:[%s2 + $0x3d0] sm:$0xff]
      %v695 = vld [vmem:[%s2 + $0x3d8] sm:$0xff]
      %v696 = vld [vmem:[%s2 + $0x3e0] sm:$0xff]
      %v697 = vld [vmem:[%s2 + $0x3e8] sm:$0xff]
      %v698 = vld [vmem:[%s2 + $0x3f0] sm:$0xff]
      %v699 = vld [vmem:[%s2 + $0x3f8] sm:$0xff]
      %v700 = vld [vmem:[%s3] sm:$0x3]
      %v702 = vlaneseq
      %v703 = vshrl.u32 %v702, 7
      %v704 = vsub.s32 0, %v703
      %v705 = vrot.slane %v700, %v704
      %v706 = vlaneseq
      %v707 = vshrl.u32 %v706, 7
      %v708 = vsub.s32 1, %v707
      %v709 = vrot.slane %v700, %v708
      %712 = vmatprep.subr.mxu0 %v603
      %713 = vmatpush1.msra.mxu0 %v602
      %714 = vmatprep.subr.mxu0 %v601
      %715 = vmatpush1.msra.mxu0 %v600
      %716 = vmatprep.subr.mxu0 %v599
      %717 = vmatpush1.msra.mxu0 %v598
      %718 = vmatprep.subr.mxu0 %v597
      %719 = vmatpush1.msra.mxu0 %v596
      %720 = vmatprep.subr.mxu0 %v595
      %721 = vmatpush1.msra.mxu0 %v594
      %722 = vmatprep.subr.mxu0 %v593
      %723 = vmatpush1.msra.mxu0 %v592
      %724 = vmatprep.subr.mxu0 %v591
      %725 = vmatpush1.msra.mxu0 %v590
      %726 = vmatprep.subr.mxu0 %v589
      %727 = vmatpush1.msra.mxu0 %v588
      %728 = vmatprep.subr.mxu0 %v587
      %729 = vmatpush1.msra.mxu0 %v586
      %730 = vmatprep.subr.mxu0 %v585
      %731 = vmatpush1.msra.mxu0 %v584
      %732 = vmatprep.subr.mxu0 %v583
      %733 = vmatpush1.msra.mxu0 %v582
      %734 = vmatprep.subr.mxu0 %v581
      %735 = vmatpush1.msra.mxu0 %v580
      %736 = vmatprep.subr.mxu0 %v579
      %737 = vmatpush1.msra.mxu0 %v578
      %738 = vmatprep.subr.mxu0 %v577
      %739 = vmatpush1.msra.mxu0 %v576
      %740 = vmatprep.subr.mxu0 %v575
      %741 = vmatpush1.msra.mxu0 %v574
      %742 = vmatprep.subr.mxu0 %v573
      %743 = vmatpush1.msra.mxu0 %v572
      %744 = vmatprep.subr.mxu0 %v635
      %745 = vmatpush2.msra.mxu0 %v634
      %746 = vmatprep.subr.mxu0 %v633
      %747 = vmatpush2.msra.mxu0 %v632
      %748 = vmatprep.subr.mxu0 %v631
      %749 = vmatpush2.msra.mxu0 %v630
      %750 = vmatprep.subr.mxu0 %v629
      %751 = vmatpush2.msra.mxu0 %v628
      %752 = vmatprep.subr.mxu0 %v627
      %753 = vmatpush2.msra.mxu0 %v626
      %754 = vmatprep.subr.mxu0 %v625
      %755 = vmatpush2.msra.mxu0 %v624
      %756 = vmatprep.subr.mxu0 %v623
      %757 = vmatpush2.msra.mxu0 %v622
      %758 = vmatprep.subr.mxu0 %v621
      %759 = vmatpush2.msra.mxu0 %v620
      %760 = vmatprep.subr.mxu0 %v619
      %761 = vmatpush2.msra.mxu0 %v618
      %762 = vmatprep.subr.mxu0 %v617
      %763 = vmatpush2.msra.mxu0 %v616
      %764 = vmatprep.subr.mxu0 %v615
      %765 = vmatpush2.msra.mxu0 %v614
      %766 = vmatprep.subr.mxu0 %v613
      %767 = vmatpush2.msra.mxu0 %v612
      %768 = vmatprep.subr.mxu0 %v611
      %769 = vmatpush2.msra.mxu0 %v610
      %770 = vmatprep.subr.mxu0 %v609
      %771 = vmatpush2.msra.mxu0 %v608
      %772 = vmatprep.subr.mxu0 %v607
      %773 = vmatpush2.msra.mxu0 %v606
      %774 = vmatprep.subr.mxu0 %v605
      %775 = vmatpush2.msra.mxu0 %v604
      %776 = vmatprep.mubr.f32.mxu0 %v509
      %777 = vmatmul.mubr.f32.gmra.mxu0 %v508
      %v778 = vpop.f32.mrf.mxu0
      %v779 = vadd.f32 %v705, %v778
      %v780 = vpop.f32.mrf.mxu0
      %v781 = vadd.f32 %v709, %v780
      %782 = vmatprep.mubr.f32.mxu0 %v513
      %783 = vmatmul.mubr.f32.gmra.mxu0 %v512
      %v784 = vpop.f32.mrf.mxu0
      %v785 = vadd.f32 %v705, %v784
      %v786 = vpop.f32.mrf.mxu0
      %v787 = vadd.f32 %v709, %v786
      %788 = vmatprep.mubr.f32.mxu0 %v517
      %789 = vmatmul.mubr.f32.gmra.mxu0 %v516
      %v790 = vpop.f32.mrf.mxu0
      %v791 = vadd.f32 %v705, %v790
      %v792 = vpop.f32.mrf.mxu0
      %v793 = vadd.f32 %v709, %v792
      %794 = vmatprep.mubr.f32.mxu0 %v521
      %795 = vmatmul.mubr.f32.gmra.mxu0 %v520
      %v796 = vpop.f32.mrf.mxu0
      %v797 = vadd.f32 %v705, %v796
      %v798 = vpop.f32.mrf.mxu0
      %v799 = vadd.f32 %v709, %v798
      %800 = vmatprep.mubr.f32.mxu0 %v525
      %801 = vmatmul.mubr.f32.gmra.mxu0 %v524
      %v802 = vpop.f32.mrf.mxu0
      %v803 = vadd.f32 %v705, %v802
      %v804 = vpop.f32.mrf.mxu0
      %v805 = vadd.f32 %v709, %v804
      %806 = vmatprep.mubr.f32.mxu0 %v529
      %807 = vmatmul.mubr.f32.gmra.mxu0 %v528
      %v808 = vpop.f32.mrf.mxu0
      %v809 = vadd.f32 %v705, %v808
      %v810 = vpop.f32.mrf.mxu0
      %v811 = vadd.f32 %v709, %v810
      %812 = vmatprep.mubr.f32.mxu0 %v533
      %813 = vmatmul.mubr.f32.gmra.mxu0 %v532
      %v814 = vpop.f32.mrf.mxu0
      %v815 = vadd.f32 %v705, %v814
      %v816 = vpop.f32.mrf.mxu0
      %v817 = vadd.f32 %v709, %v816
      %818 = vmatprep.mubr.f32.mxu0 %v537
      %819 = vmatmul.mubr.f32.gmra.mxu0 %v536
      %v820 = vpop.f32.mrf.mxu0
      %v821 = vadd.f32 %v705, %v820
      %v822 = vpop.f32.mrf.mxu0
      %v823 = vadd.f32 %v709, %v822
      %824 = vmatprep.mubr.f32.mxu0 %v541
      %825 = vmatmul.mubr.f32.gmra.mxu0 %v540
      %v826 = vpop.f32.mrf.mxu0
      %v827 = vadd.f32 %v705, %v826
      %v828 = vpop.f32.mrf.mxu0
      %v829 = vadd.f32 %v709, %v828
      %830 = vmatprep.mubr.f32.mxu0 %v545
      %831 = vmatmul.mubr.f32.gmra.mxu0 %v544
      %v832 = vpop.f32.mrf.mxu0
      %v833 = vadd.f32 %v705, %v832
      %v834 = vpop.f32.mrf.mxu0
      %v835 = vadd.f32 %v709, %v834
      %836 = vmatprep.mubr.f32.mxu0 %v549
      %837 = vmatmul.mubr.f32.gmra.mxu0 %v548
      %v838 = vpop.f32.mrf.mxu0
      %v839 = vadd.f32 %v705, %v838
      %v840 = vpop.f32.mrf.mxu0
      %v841 = vadd.f32 %v709, %v840
      %842 = vmatprep.mubr.f32.mxu0 %v553
      %843 = vmatmul.mubr.f32.gmra.mxu0 %v552
      %v844 = vpop.f32.mrf.mxu0
      %v845 = vadd.f32 %v705, %v844
      %v846 = vpop.f32.mrf.mxu0
      %v847 = vadd.f32 %v709, %v846
      %848 = vmatprep.mubr.f32.mxu0 %v557
      %849 = vmatmul.mubr.f32.gmra.mxu0 %v556
      %v850 = vpop.f32.mrf.mxu0
      %v851 = vadd.f32 %v705, %v850
      %v852 = vpop.f32.mrf.mxu0
      %v853 = vadd.f32 %v709, %v852
      %854 = vmatprep.mubr.f32.mxu0 %v561
      %855 = vmatmul.mubr.f32.gmra.mxu0 %v560
      %v856 = vpop.f32.mrf.mxu0
      %v857 = vadd.f32 %v705, %v856
      %v858 = vpop.f32.mrf.mxu0
      %v859 = vadd.f32 %v709, %v858
      %860 = vmatprep.mubr.f32.mxu0 %v565
      %861 = vmatmul.mubr.f32.gmra.mxu0 %v564
      %v862 = vpop.f32.mrf.mxu0
      %v863 = vadd.f32 %v705, %v862
      %v864 = vpop.f32.mrf.mxu0
      %v865 = vadd.f32 %v709, %v864
      %866 = vmatprep.mubr.f32.mxu0 %v569
      %867 = vmatmul.mubr.f32.gmra.mxu0 %v568
      %v868 = vpop.f32.mrf.mxu0
      %v869 = vadd.f32 %v705, %v868
      %v870 = vpop.f32.mrf.mxu0
      %v871 = vadd.f32 %v709, %v870
      %872 = vdwg.mxu0
      %873 = vmatprep.subr.mxu0 %v667
      %874 = vmatpush1.msra.mxu0 %v666
      %875 = vmatprep.subr.mxu0 %v665
      %876 = vmatpush1.msra.mxu0 %v664
      %877 = vmatprep.subr.mxu0 %v663
      %878 = vmatpush1.msra.mxu0 %v662
      %879 = vmatprep.subr.mxu0 %v661
      %880 = vmatpush1.msra.mxu0 %v660
      %881 = vmatprep.subr.mxu0 %v659
      %882 = vmatpush1.msra.mxu0 %v658
      %883 = vmatprep.subr.mxu0 %v657
      %884 = vmatpush1.msra.mxu0 %v656
      %885 = vmatprep.subr.mxu0 %v655
      %886 = vmatpush1.msra.mxu0 %v654
      %887 = vmatprep.subr.mxu0 %v653
      %888 = vmatpush1.msra.mxu0 %v652
      %889 = vmatprep.subr.mxu0 %v651
      %890 = vmatpush1.msra.mxu0 %v650
      %891 = vmatprep.subr.mxu0 %v649
      %892 = vmatpush1.msra.mxu0 %v648
      %893 = vmatprep.subr.mxu0 %v647
      %894 = vmatpush1.msra.mxu0 %v646
      %895 = vmatprep.subr.mxu0 %v645
      %896 = vmatpush1.msra.mxu0 %v644
      %897 = vmatprep.subr.mxu0 %v643
      %898 = vmatpush1.msra.mxu0 %v642
      %899 = vmatprep.subr.mxu0 %v641
      %900 = vmatpush1.msra.mxu0 %v640
      %901 = vmatprep.subr.mxu0 %v639
      %902 = vmatpush1.msra.mxu0 %v638
      %903 = vmatprep.subr.mxu0 %v637
      %904 = vmatpush1.msra.mxu0 %v636
      %905 = vmatprep.subr.mxu0 %v699
      %906 = vmatpush2.msra.mxu0 %v698
      %907 = vmatprep.subr.mxu0 %v697
      %908 = vmatpush2.msra.mxu0 %v696
      %909 = vmatprep.subr.mxu0 %v695
      %910 = vmatpush2.msra.mxu0 %v694
      %911 = vmatprep.subr.mxu0 %v693
      %912 = vmatpush2.msra.mxu0 %v692
      %913 = vmatprep.subr.mxu0 %v691
      %914 = vmatpush2.msra.mxu0 %v690
      %915 = vmatprep.subr.mxu0 %v689
      %916 = vmatpush2.msra.mxu0 %v688
      %917 = vmatprep.subr.mxu0 %v687
      %918 = vmatpush2.msra.mxu0 %v686
      %919 = vmatprep.subr.mxu0 %v685
      %920 = vmatpush2.msra.mxu0 %v684
      %921 = vmatprep.subr.mxu0 %v683
      %922 = vmatpush2.msra.mxu0 %v682
      %923 = vmatprep.subr.mxu0 %v681
      %924 = vmatpush2.msra.mxu0 %v680
      %925 = vmatprep.subr.mxu0 %v679
      %926 = vmatpush2.msra.mxu0 %v678
      %927 = vmatprep.subr.mxu0 %v677
      %928 = vmatpush2.msra.mxu0 %v676
      %929 = vmatprep.subr.mxu0 %v675
      %930 = vmatpush2.msra.mxu0 %v674
      %931 = vmatprep.subr.mxu0 %v673
      %932 = vmatpush2.msra.mxu0 %v672
      %933 = vmatprep.subr.mxu0 %v671
      %934 = vmatpush2.msra.mxu0 %v670
      %935 = vmatprep.subr.mxu0 %v669
      %936 = vmatpush2.msra.mxu0 %v668
      %937 = vmatprep.mubr.f32.mxu0 %v511
      %938 = vmatmul.mubr.f32.gmra.mxu0 %v510
      %v939 = vpop.f32.mrf.mxu0
      %v940 = vadd.f32 %v779, %v939
      %v941 = vpop.f32.mrf.mxu0
      %v942 = vadd.f32 %v781, %v941
      %943 = vmatprep.mubr.f32.mxu0 %v515
      %944 = vmatmul.mubr.f32.gmra.mxu0 %v514
      %v945 = vpop.f32.mrf.mxu0
      %v946 = vadd.f32 %v785, %v945
      %v947 = vpop.f32.mrf.mxu0
      %v948 = vadd.f32 %v787, %v947
      %949 = vmatprep.mubr.f32.mxu0 %v519
      %950 = vmatmul.mubr.f32.gmra.mxu0 %v518
      %v951 = vpop.f32.mrf.mxu0
      %v952 = vadd.f32 %v791, %v951
      %v953 = vpop.f32.mrf.mxu0
      %v954 = vadd.f32 %v793, %v953
      %955 = vmatprep.mubr.f32.mxu0 %v523
      %956 = vmatmul.mubr.f32.gmra.mxu0 %v522
      %v957 = vpop.f32.mrf.mxu0
      %v958 = vadd.f32 %v797, %v957
      %v959 = vpop.f32.mrf.mxu0
      %v960 = vadd.f32 %v799, %v959
      %961 = vmatprep.mubr.f32.mxu0 %v527
      %962 = vmatmul.mubr.f32.gmra.mxu0 %v526
      %v963 = vpop.f32.mrf.mxu0
      %v964 = vadd.f32 %v803, %v963
      %v965 = vpop.f32.mrf.mxu0
      %v966 = vadd.f32 %v805, %v965
      %967 = vmatprep.mubr.f32.mxu0 %v531
      %968 = vmatmul.mubr.f32.gmra.mxu0 %v530
      %v969 = vpop.f32.mrf.mxu0
      %v970 = vadd.f32 %v809, %v969
      %v971 = vpop.f32.mrf.mxu0
      %v972 = vadd.f32 %v811, %v971
      %973 = vmatprep.mubr.f32.mxu0 %v535
      %974 = vmatmul.mubr.f32.gmra.mxu0 %v534
      %v975 = vpop.f32.mrf.mxu0
      %v976 = vadd.f32 %v815, %v975
      %v977 = vpop.f32.mrf.mxu0
      %v978 = vadd.f32 %v817, %v977
      %979 = vmatprep.mubr.f32.mxu0 %v539
      %980 = vmatmul.mubr.f32.gmra.mxu0 %v538
      %v981 = vpop.f32.mrf.mxu0
      %v982 = vadd.f32 %v821, %v981
      %v983 = vpop.f32.mrf.mxu0
      %v984 = vadd.f32 %v823, %v983
      %985 = vmatprep.mubr.f32.mxu0 %v543
      %986 = vmatmul.mubr.f32.gmra.mxu0 %v542
      %v987 = vpop.f32.mrf.mxu0
      %v988 = vadd.f32 %v827, %v987
      %v989 = vpop.f32.mrf.mxu0
      %v990 = vadd.f32 %v829, %v989
      %991 = vmatprep.mubr.f32.mxu0 %v547
      %992 = vmatmul.mubr.f32.gmra.mxu0 %v546
      %v993 = vpop.f32.mrf.mxu0
      %v994 = vadd.f32 %v833, %v993
      %v995 = vpop.f32.mrf.mxu0
      %v996 = vadd.f32 %v835, %v995
      %997 = vmatprep.mubr.f32.mxu0 %v551
      %998 = vmatmul.mubr.f32.gmra.mxu0 %v550
      %v999 = vpop.f32.mrf.mxu0
      %v1000 = vadd.f32 %v839, %v999
      %v1001 = vpop.f32.mrf.mxu0
      %v1002 = vadd.f32 %v841, %v1001
      %1003 = vmatprep.mubr.f32.mxu0 %v555
      %1004 = vmatmul.mubr.f32.gmra.mxu0 %v554
      %v1005 = vpop.f32.mrf.mxu0
      %v1006 = vadd.f32 %v845, %v1005
      %v1007 = vpop.f32.mrf.mxu0
      %v1008 = vadd.f32 %v847, %v1007
      %1009 = vmatprep.mubr.f32.mxu0 %v559
      %1010 = vmatmul.mubr.f32.gmra.mxu0 %v558
      %v1011 = vpop.f32.mrf.mxu0
      %v1012 = vadd.f32 %v851, %v1011
      %v1013 = vpop.f32.mrf.mxu0
      %v1014 = vadd.f32 %v853, %v1013
      %1015 = vmatprep.mubr.f32.mxu0 %v563
      %1016 = vmatmul.mubr.f32.gmra.mxu0 %v562
      %v1017 = vpop.f32.mrf.mxu0
      %v1018 = vadd.f32 %v857, %v1017
      %v1019 = vpop.f32.mrf.mxu0
      %v1020 = vadd.f32 %v859, %v1019
      %1021 = vmatprep.mubr.f32.mxu0 %v567
      %1022 = vmatmul.mubr.f32.gmra.mxu0 %v566
      %v1023 = vpop.f32.mrf.mxu0
      %v1024 = vadd.f32 %v863, %v1023
      %v1025 = vpop.f32.mrf.mxu0
      %v1026 = vadd.f32 %v865, %v1025
      %1027 = vmatprep.mubr.f32.mxu0 %v571
      %1028 = vmatmul.mubr.f32.gmra.mxu0 %v570
      %v1029 = vpop.f32.mrf.mxu0
      %v1030 = vadd.f32 %v869, %v1029
      %v1031 = vpop.f32.mrf.mxu0
      %v1032 = vadd.f32 %v871, %v1031
      %1033 = vdwg.mxu0
      %v1034 = vmax.f32 %v940, 0.0
      %v1035 = vmax.f32 %v942, 0.0
      %v1036 = vmax.f32 %v946, 0.0
      %v1037 = vmax.f32 %v948, 0.0
      %v1038 = vmax.f32 %v952, 0.0
      %v1039 = vmax.f32 %v954, 0.0
      %v1040 = vmax.f32 %v958, 0.0
      %v1041 = vmax.f32 %v960, 0.0
      %v1042 = vmax.f32 %v964, 0.0
      %v1043 = vmax.f32 %v966, 0.0
      %v1044 = vmax.f32 %v970, 0.0
      %v1045 = vmax.f32 %v972, 0.0
      %v1046 = vmax.f32 %v976, 0.0
      %v1047 = vmax.f32 %v978, 0.0
      %v1048 = vmax.f32 %v982, 0.0
      %v1049 = vmax.f32 %v984, 0.0
      %v1050 = vmax.f32 %v988, 0.0
      %v1051 = vmax.f32 %v990, 0.0
      %v1052 = vmax.f32 %v994, 0.0
      %v1053 = vmax.f32 %v996, 0.0
      %v1054 = vmax.f32 %v1000, 0.0
      %v1055 = vmax.f32 %v1002, 0.0
      %v1056 = vmax.f32 %v1006, 0.0
      %v1057 = vmax.f32 %v1008, 0.0
      %v1058 = vmax.f32 %v1012, 0.0
      %v1059 = vmax.f32 %v1014, 0.0
      %v1060 = vmax.f32 %v1018, 0.0
      %v1061 = vmax.f32 %v1020, 0.0
      %v1062 = vmax.f32 %v1024, 0.0
      %v1063 = vmax.f32 %v1026, 0.0
      %v1064 = vmax.f32 %v1030, 0.0
      %v1065 = vmax.f32 %v1032, 0.0
      %v1066 = vld [vmem:[%s488] sm:$0xff]
      %v1067 = vld [vmem:[%s488 + $0x8] sm:$0xff]
      %v1068 = vld [vmem:[%s488 + $0x10] sm:$0xff]
      %v1069 = vld [vmem:[%s488 + $0x18] sm:$0xff]
      %v1070 = vld [vmem:[%s488 + $0x20] sm:$0xff]
      %v1071 = vld [vmem:[%s488 + $0x28] sm:$0xff]
      %v1072 = vld [vmem:[%s488 + $0x30] sm:$0xff]
      %v1073 = vld [vmem:[%s488 + $0x38] sm:$0xff]
      %v1074 = vld [vmem:[%s488 + $0x40] sm:$0xff]
      %v1075 = vld [vmem:[%s488 + $0x48] sm:$0xff]
      %v1076 = vld [vmem:[%s488 + $0x50] sm:$0xff]
      %v1077 = vld [vmem:[%s488 + $0x58] sm:$0xff]
      %v1078 = vld [vmem:[%s488 + $0x60] sm:$0xff]
      %v1079 = vld [vmem:[%s488 + $0x68] sm:$0xff]
      %v1080 = vld [vmem:[%s488 + $0x70] sm:$0xff]
      %v1081 = vld [vmem:[%s488 + $0x78] sm:$0xff]
      %v1082 = vld [vmem:[%s488 + $0x80] sm:$0xff]
      %v1083 = vld [vmem:[%s488 + $0x88] sm:$0xff]
      %v1084 = vld [vmem:[%s488 + $0x90] sm:$0xff]
      %v1085 = vld [vmem:[%s488 + $0x98] sm:$0xff]
      %v1086 = vld [vmem:[%s488 + $0xa0] sm:$0xff]
      %v1087 = vld [vmem:[%s488 + $0xa8] sm:$0xff]
      %v1088 = vld [vmem:[%s488 + $0xb0] sm:$0xff]
      %v1089 = vld [vmem:[%s488 + $0xb8] sm:$0xff]
      %v1090 = vld [vmem:[%s488 + $0xc0] sm:$0xff]
      %v1091 = vld [vmem:[%s488 + $0xc8] sm:$0xff]
      %v1092 = vld [vmem:[%s488 + $0xd0] sm:$0xff]
      %v1093 = vld [vmem:[%s488 + $0xd8] sm:$0xff]
      %v1094 = vld [vmem:[%s488 + $0xe0] sm:$0xff]
      %v1095 = vld [vmem:[%s488 + $0xe8] sm:$0xff]
      %v1096 = vld [vmem:[%s488 + $0xf0] sm:$0xff]
      %v1097 = vld [vmem:[%s488 + $0xf8] sm:$0xff]
      %v1098 = vld [vmem:[%s488 + $0x100] sm:$0xff]
      %v1099 = vld [vmem:[%s488 + $0x108] sm:$0xff]
      %v1100 = vld [vmem:[%s488 + $0x110] sm:$0xff]
      %v1101 = vld [vmem:[%s488 + $0x118] sm:$0xff]
      %v1102 = vld [vmem:[%s488 + $0x120] sm:$0xff]
      %v1103 = vld [vmem:[%s488 + $0x128] sm:$0xff]
      %v1104 = vld [vmem:[%s488 + $0x130] sm:$0xff]
      %v1105 = vld [vmem:[%s488 + $0x138] sm:$0xff]
      %v1106 = vld [vmem:[%s488 + $0x140] sm:$0xff]
      %v1107 = vld [vmem:[%s488 + $0x148] sm:$0xff]
      %v1108 = vld [vmem:[%s488 + $0x150] sm:$0xff]
      %v1109 = vld [vmem:[%s488 + $0x158] sm:$0xff]
      %v1110 = vld [vmem:[%s488 + $0x160] sm:$0xff]
      %v1111 = vld [vmem:[%s488 + $0x168] sm:$0xff]
      %v1112 = vld [vmem:[%s488 + $0x170] sm:$0xff]
      %v1113 = vld [vmem:[%s488 + $0x178] sm:$0xff]
      %v1114 = vld [vmem:[%s488 + $0x180] sm:$0xff]
      %v1115 = vld [vmem:[%s488 + $0x188] sm:$0xff]
      %v1116 = vld [vmem:[%s488 + $0x190] sm:$0xff]
      %v1117 = vld [vmem:[%s488 + $0x198] sm:$0xff]
      %v1118 = vld [vmem:[%s488 + $0x1a0] sm:$0xff]
      %v1119 = vld [vmem:[%s488 + $0x1a8] sm:$0xff]
      %v1120 = vld [vmem:[%s488 + $0x1b0] sm:$0xff]
      %v1121 = vld [vmem:[%s488 + $0x1b8] sm:$0xff]
      %v1122 = vld [vmem:[%s488 + $0x1c0] sm:$0xff]
      %v1123 = vld [vmem:[%s488 + $0x1c8] sm:$0xff]
      %v1124 = vld [vmem:[%s488 + $0x1d0] sm:$0xff]
      %v1125 = vld [vmem:[%s488 + $0x1d8] sm:$0xff]
      %v1126 = vld [vmem:[%s488 + $0x1e0] sm:$0xff]
      %v1127 = vld [vmem:[%s488 + $0x1e8] sm:$0xff]
      %v1128 = vld [vmem:[%s488 + $0x1f0] sm:$0xff]
      %v1129 = vld [vmem:[%s488 + $0x1f8] sm:$0xff]
      %v1130 = vld [vmem:[%s4] sm:$0xff]
      %v1131 = vld [vmem:[%s4 + $0x8] sm:$0xff]
      %v1132 = vld [vmem:[%s4 + $0x10] sm:$0xff]
      %v1133 = vld [vmem:[%s4 + $0x18] sm:$0xff]
      %v1134 = vld [vmem:[%s4 + $0x20] sm:$0xff]
      %v1135 = vld [vmem:[%s4 + $0x28] sm:$0xff]
      %v1136 = vld [vmem:[%s4 + $0x30] sm:$0xff]
      %v1137 = vld [vmem:[%s4 + $0x38] sm:$0xff]
      %v1138 = vld [vmem:[%s4 + $0x40] sm:$0xff]
      %v1139 = vld [vmem:[%s4 + $0x48] sm:$0xff]
      %v1140 = vld [vmem:[%s4 + $0x50] sm:$0xff]
      %v1141 = vld [vmem:[%s4 + $0x58] sm:$0xff]
      %v1142 = vld [vmem:[%s4 + $0x60] sm:$0xff]
      %v1143 = vld [vmem:[%s4 + $0x68] sm:$0xff]
      %v1144 = vld [vmem:[%s4 + $0x70] sm:$0xff]
      %v1145 = vld [vmem:[%s4 + $0x78] sm:$0xff]
      %v1146 = vld [vmem:[%s4 + $0x80] sm:$0xff]
      %v1147 = vld [vmem:[%s4 + $0x88] sm:$0xff]
      %v1148 = vld [vmem:[%s4 + $0x90] sm:$0xff]
      %v1149 = vld [vmem:[%s4 + $0x98] sm:$0xff]
      %v1150 = vld [vmem:[%s4 + $0xa0] sm:$0xff]
      %v1151 = vld [vmem:[%s4 + $0xa8] sm:$0xff]
      %v1152 = vld [vmem:[%s4 + $0xb0] sm:$0xff]
      %v1153 = vld [vmem:[%s4 + $0xb8] sm:$0xff]
      %v1154 = vld [vmem:[%s4 + $0xc0] sm:$0xff]
      %v1155 = vld [vmem:[%s4 + $0xc8] sm:$0xff]
      %v1156 = vld [vmem:[%s4 + $0xd0] sm:$0xff]
      %v1157 = vld [vmem:[%s4 + $0xd8] sm:$0xff]
      %v1158 = vld [vmem:[%s4 + $0xe0] sm:$0xff]
      %v1159 = vld [vmem:[%s4 + $0xe8] sm:$0xff]
      %v1160 = vld [vmem:[%s4 + $0xf0] sm:$0xff]
      %v1161 = vld [vmem:[%s4 + $0xf8] sm:$0xff]
      %v1162 = vld [vmem:[%s4 + $0x100] sm:$0xff]
      %v1163 = vld [vmem:[%s4 + $0x108] sm:$0xff]
      %v1164 = vld [vmem:[%s4 + $0x110] sm:$0xff]
      %v1165 = vld [vmem:[%s4 + $0x118] sm:$0xff]
      %v1166 = vld [vmem:[%s4 + $0x120] sm:$0xff]
      %v1167 = vld [vmem:[%s4 + $0x128] sm:$0xff]
      %v1168 = vld [vmem:[%s4 + $0x130] sm:$0xff]
      %v1169 = vld [vmem:[%s4 + $0x138] sm:$0xff]
      %v1170 = vld [vmem:[%s4 + $0x140] sm:$0xff]
      %v1171 = vld [vmem:[%s4 + $0x148] sm:$0xff]
      %v1172 = vld [vmem:[%s4 + $0x150] sm:$0xff]
      %v1173 = vld [vmem:[%s4 + $0x158] sm:$0xff]
      %v1174 = vld [vmem:[%s4 + $0x160] sm:$0xff]
      %v1175 = vld [vmem:[%s4 + $0x168] sm:$0xff]
      %v1176 = vld [vmem:[%s4 + $0x170] sm:$0xff]
      %v1177 = vld [vmem:[%s4 + $0x178] sm:$0xff]
      %v1178 = vld [vmem:[%s4 + $0x180] sm:$0xff]
      %v1179 = vld [vmem:[%s4 + $0x188] sm:$0xff]
      %v1180 = vld [vmem:[%s4 + $0x190] sm:$0xff]
      %v1181 = vld [vmem:[%s4 + $0x198] sm:$0xff]
      %v1182 = vld [vmem:[%s4 + $0x1a0] sm:$0xff]
      %v1183 = vld [vmem:[%s4 + $0x1a8] sm:$0xff]
      %v1184 = vld [vmem:[%s4 + $0x1b0] sm:$0xff]
      %v1185 = vld [vmem:[%s4 + $0x1b8] sm:$0xff]
      %v1186 = vld [vmem:[%s4 + $0x1c0] sm:$0xff]
      %v1187 = vld [vmem:[%s4 + $0x1c8] sm:$0xff]
      %v1188 = vld [vmem:[%s4 + $0x1d0] sm:$0xff]
      %v1189 = vld [vmem:[%s4 + $0x1d8] sm:$0xff]
      %v1190 = vld [vmem:[%s4 + $0x1e0] sm:$0xff]
      %v1191 = vld [vmem:[%s4 + $0x1e8] sm:$0xff]
      %v1192 = vld [vmem:[%s4 + $0x1f0] sm:$0xff]
      %v1193 = vld [vmem:[%s4 + $0x1f8] sm:$0xff]
      %v1194 = vld [vmem:[%s4 + $0x200] sm:$0xff]
      %v1195 = vld [vmem:[%s4 + $0x208] sm:$0xff]
      %v1196 = vld [vmem:[%s4 + $0x210] sm:$0xff]
      %v1197 = vld [vmem:[%s4 + $0x218] sm:$0xff]
      %v1198 = vld [vmem:[%s4 + $0x220] sm:$0xff]
      %v1199 = vld [vmem:[%s4 + $0x228] sm:$0xff]
      %v1200 = vld [vmem:[%s4 + $0x230] sm:$0xff]
      %v1201 = vld [vmem:[%s4 + $0x238] sm:$0xff]
      %v1202 = vld [vmem:[%s4 + $0x240] sm:$0xff]
      %v1203 = vld [vmem:[%s4 + $0x248] sm:$0xff]
      %v1204 = vld [vmem:[%s4 + $0x250] sm:$0xff]
      %v1205 = vld [vmem:[%s4 + $0x258] sm:$0xff]
      %v1206 = vld [vmem:[%s4 + $0x260] sm:$0xff]
      %v1207 = vld [vmem:[%s4 + $0x268] sm:$0xff]
      %v1208 = vld [vmem:[%s4 + $0x270] sm:$0xff]
      %v1209 = vld [vmem:[%s4 + $0x278] sm:$0xff]
      %v1210 = vld [vmem:[%s4 + $0x280] sm:$0xff]
      %v1211 = vld [vmem:[%s4 + $0x288] sm:$0xff]
      %v1212 = vld [vmem:[%s4 + $0x290] sm:$0xff]
      %v1213 = vld [vmem:[%s4 + $0x298] sm:$0xff]
      %v1214 = vld [vmem:[%s4 + $0x2a0] sm:$0xff]
      %v1215 = vld [vmem:[%s4 + $0x2a8] sm:$0xff]
      %v1216 = vld [vmem:[%s4 + $0x2b0] sm:$0xff]
      %v1217 = vld [vmem:[%s4 + $0x2b8] sm:$0xff]
      %v1218 = vld [vmem:[%s4 + $0x2c0] sm:$0xff]
      %v1219 = vld [vmem:[%s4 + $0x2c8] sm:$0xff]
      %v1220 = vld [vmem:[%s4 + $0x2d0] sm:$0xff]
      %v1221 = vld [vmem:[%s4 + $0x2d8] sm:$0xff]
      %v1222 = vld [vmem:[%s4 + $0x2e0] sm:$0xff]
      %v1223 = vld [vmem:[%s4 + $0x2e8] sm:$0xff]
      %v1224 = vld [vmem:[%s4 + $0x2f0] sm:$0xff]
      %v1225 = vld [vmem:[%s4 + $0x2f8] sm:$0xff]
      %v1226 = vld [vmem:[%s4 + $0x300] sm:$0xff]
      %v1227 = vld [vmem:[%s4 + $0x308] sm:$0xff]
      %v1228 = vld [vmem:[%s4 + $0x310] sm:$0xff]
      %v1229 = vld [vmem:[%s4 + $0x318] sm:$0xff]
      %v1230 = vld [vmem:[%s4 + $0x320] sm:$0xff]
      %v1231 = vld [vmem:[%s4 + $0x328] sm:$0xff]
      %v1232 = vld [vmem:[%s4 + $0x330] sm:$0xff]
      %v1233 = vld [vmem:[%s4 + $0x338] sm:$0xff]
      %v1234 = vld [vmem:[%s4 + $0x340] sm:$0xff]
      %v1235 = vld [vmem:[%s4 + $0x348] sm:$0xff]
      %v1236 = vld [vmem:[%s4 + $0x350] sm:$0xff]
      %v1237 = vld [vmem:[%s4 + $0x358] sm:$0xff]
      %v1238 = vld [vmem:[%s4 + $0x360] sm:$0xff]
      %v1239 = vld [vmem:[%s4 + $0x368] sm:$0xff]
      %v1240 = vld [vmem:[%s4 + $0x370] sm:$0xff]
      %v1241 = vld [vmem:[%s4 + $0x378] sm:$0xff]
      %v1242 = vld [vmem:[%s4 + $0x380] sm:$0xff]
      %v1243 = vld [vmem:[%s4 + $0x388] sm:$0xff]
      %v1244 = vld [vmem:[%s4 + $0x390] sm:$0xff]
      %v1245 = vld [vmem:[%s4 + $0x398] sm:$0xff]
      %v1246 = vld [vmem:[%s4 + $0x3a0] sm:$0xff]
      %v1247 = vld [vmem:[%s4 + $0x3a8] sm:$0xff]
      %v1248 = vld [vmem:[%s4 + $0x3b0] sm:$0xff]
      %v1249 = vld [vmem:[%s4 + $0x3b8] sm:$0xff]
      %v1250 = vld [vmem:[%s4 + $0x3c0] sm:$0xff]
      %v1251 = vld [vmem:[%s4 + $0x3c8] sm:$0xff]
      %v1252 = vld [vmem:[%s4 + $0x3d0] sm:$0xff]
      %v1253 = vld [vmem:[%s4 + $0x3d8] sm:$0xff]
      %v1254 = vld [vmem:[%s4 + $0x3e0] sm:$0xff]
      %v1255 = vld [vmem:[%s4 + $0x3e8] sm:$0xff]
      %v1256 = vld [vmem:[%s4 + $0x3f0] sm:$0xff]
      %v1257 = vld [vmem:[%s4 + $0x3f8] sm:$0xff]
      %v1258 = vld [vmem:[%s5] sm:$0x3]
      %v1260 = vlaneseq
      %v1261 = vshrl.u32 %v1260, 7
      %v1262 = vsub.s32 0, %v1261
      %v1263 = vrot.slane %v1258, %v1262
      %v1264 = vlaneseq
      %v1265 = vshrl.u32 %v1264, 7
      %v1266 = vsub.s32 1, %v1265
      %v1267 = vrot.slane %v1258, %v1266
      %1270 = vmatprep.subr.mxu0 %v1161
      %1271 = vmatpush1.msra.mxu0 %v1160
      %1272 = vmatprep.subr.mxu0 %v1159
      %1273 = vmatpush1.msra.mxu0 %v1158
      %1274 = vmatprep.subr.mxu0 %v1157
      %1275 = vmatpush1.msra.mxu0 %v1156
      %1276 = vmatprep.subr.mxu0 %v1155
      %1277 = vmatpush1.msra.mxu0 %v1154
      %1278 = vmatprep.subr.mxu0 %v1153
      %1279 = vmatpush1.msra.mxu0 %v1152
      %1280 = vmatprep.subr.mxu0 %v1151
      %1281 = vmatpush1.msra.mxu0 %v1150
      %1282 = vmatprep.subr.mxu0 %v1149
      %1283 = vmatpush1.msra.mxu0 %v1148
      %1284 = vmatprep.subr.mxu0 %v1147
      %1285 = vmatpush1.msra.mxu0 %v1146
      %1286 = vmatprep.subr.mxu0 %v1145
      %1287 = vmatpush1.msra.mxu0 %v1144
      %1288 = vmatprep.subr.mxu0 %v1143
      %1289 = vmatpush1.msra.mxu0 %v1142
      %1290 = vmatprep.subr.mxu0 %v1141
      %1291 = vmatpush1.msra.mxu0 %v1140
      %1292 = vmatprep.subr.mxu0 %v1139
      %1293 = vmatpush1.msra.mxu0 %v1138
      %1294 = vmatprep.subr.mxu0 %v1137
      %1295 = vmatpush1.msra.mxu0 %v1136
      %1296 = vmatprep.subr.mxu0 %v1135
      %1297 = vmatpush1.msra.mxu0 %v1134
      %1298 = vmatprep.subr.mxu0 %v1133
      %1299 = vmatpush1.msra.mxu0 %v1132
      %1300 = vmatprep.subr.mxu0 %v1131
      %1301 = vmatpush1.msra.mxu0 %v1130
      %1302 = vmatprep.subr.mxu0 %v1193
      %1303 = vmatpush2.msra.mxu0 %v1192
      %1304 = vmatprep.subr.mxu0 %v1191
      %1305 = vmatpush2.msra.mxu0 %v1190
      %1306 = vmatprep.subr.mxu0 %v1189
      %1307 = vmatpush2.msra.mxu0 %v1188
      %1308 = vmatprep.subr.mxu0 %v1187
      %1309 = vmatpush2.msra.mxu0 %v1186
      %1310 = vmatprep.subr.mxu0 %v1185
      %1311 = vmatpush2.msra.mxu0 %v1184
      %1312 = vmatprep.subr.mxu0 %v1183
      %1313 = vmatpush2.msra.mxu0 %v1182
      %1314 = vmatprep.subr.mxu0 %v1181
      %1315 = vmatpush2.msra.mxu0 %v1180
      %1316 = vmatprep.subr.mxu0 %v1179
      %1317 = vmatpush2.msra.mxu0 %v1178
      %1318 = vmatprep.subr.mxu0 %v1177
      %1319 = vmatpush2.msra.mxu0 %v1176
      %1320 = vmatprep.subr.mxu0 %v1175
      %1321 = vmatpush2.msra.mxu0 %v1174
      %1322 = vmatprep.subr.mxu0 %v1173
      %1323 = vmatpush2.msra.mxu0 %v1172
      %1324 = vmatprep.subr.mxu0 %v1171
      %1325 = vmatpush2.msra.mxu0 %v1170
      %1326 = vmatprep.subr.mxu0 %v1169
      %1327 = vmatpush2.msra.mxu0 %v1168
      %1328 = vmatprep.subr.mxu0 %v1167
      %1329 = vmatpush2.msra.mxu0 %v1166
      %1330 = vmatprep.subr.mxu0 %v1165
      %1331 = vmatpush2.msra.mxu0 %v1164
      %1332 = vmatprep.subr.mxu0 %v1163
      %1333 = vmatpush2.msra.mxu0 %v1162
      %1334 = vmatprep.mubr.f32.mxu0 %v1067
      %1335 = vmatmul.mubr.f32.gmra.mxu0 %v1066
      %v1336 = vpop.f32.mrf.mxu0
      %v1337 = vadd.f32 %v1263, %v1336
      %v1338 = vpop.f32.mrf.mxu0
      %v1339 = vadd.f32 %v1267, %v1338
      %1340 = vmatprep.mubr.f32.mxu0 %v1071
      %1341 = vmatmul.mubr.f32.gmra.mxu0 %v1070
      %v1342 = vpop.f32.mrf.mxu0
      %v1343 = vadd.f32 %v1263, %v1342
      %v1344 = vpop.f32.mrf.mxu0
      %v1345 = vadd.f32 %v1267, %v1344
      %1346 = vmatprep.mubr.f32.mxu0 %v1075
      %1347 = vmatmul.mubr.f32.gmra.mxu0 %v1074
      %v1348 = vpop.f32.mrf.mxu0
      %v1349 = vadd.f32 %v1263, %v1348
      %v1350 = vpop.f32.mrf.mxu0
      %v1351 = vadd.f32 %v1267, %v1350
      %1352 = vmatprep.mubr.f32.mxu0 %v1079
      %1353 = vmatmul.mubr.f32.gmra.mxu0 %v1078
      %v1354 = vpop.f32.mrf.mxu0
      %v1355 = vadd.f32 %v1263, %v1354
      %v1356 = vpop.f32.mrf.mxu0
      %v1357 = vadd.f32 %v1267, %v1356
      %1358 = vmatprep.mubr.f32.mxu0 %v1083
      %1359 = vmatmul.mubr.f32.gmra.mxu0 %v1082
      %v1360 = vpop.f32.mrf.mxu0
      %v1361 = vadd.f32 %v1263, %v1360
      %v1362 = vpop.f32.mrf.mxu0
      %v1363 = vadd.f32 %v1267, %v1362
      %1364 = vmatprep.mubr.f32.mxu0 %v1087
      %1365 = vmatmul.mubr.f32.gmra.mxu0 %v1086
      %v1366 = vpop.f32.mrf.mxu0
      %v1367 = vadd.f32 %v1263, %v1366
      %v1368 = vpop.f32.mrf.mxu0
      %v1369 = vadd.f32 %v1267, %v1368
      %1370 = vmatprep.mubr.f32.mxu0 %v1091
      %1371 = vmatmul.mubr.f32.gmra.mxu0 %v1090
      %v1372 = vpop.f32.mrf.mxu0
      %v1373 = vadd.f32 %v1263, %v1372
      %v1374 = vpop.f32.mrf.mxu0
      %v1375 = vadd.f32 %v1267, %v1374
      %1376 = vmatprep.mubr.f32.mxu0 %v1095
      %1377 = vmatmul.mubr.f32.gmra.mxu0 %v1094
      %v1378 = vpop.f32.mrf.mxu0
      %v1379 = vadd.f32 %v1263, %v1378
      %v1380 = vpop.f32.mrf.mxu0
      %v1381 = vadd.f32 %v1267, %v1380
      %1382 = vmatprep.mubr.f32.mxu0 %v1099
      %1383 = vmatmul.mubr.f32.gmra.mxu0 %v1098
      %v1384 = vpop.f32.mrf.mxu0
      %v1385 = vadd.f32 %v1263, %v1384
      %v1386 = vpop.f32.mrf.mxu0
      %v1387 = vadd.f32 %v1267, %v1386
      %1388 = vmatprep.mubr.f32.mxu0 %v1103
      %1389 = vmatmul.mubr.f32.gmra.mxu0 %v1102
      %v1390 = vpop.f32.mrf.mxu0
      %v1391 = vadd.f32 %v1263, %v1390
      %v1392 = vpop.f32.mrf.mxu0
      %v1393 = vadd.f32 %v1267, %v1392
      %1394 = vmatprep.mubr.f32.mxu0 %v1107
      %1395 = vmatmul.mubr.f32.gmra.mxu0 %v1106
      %v1396 = vpop.f32.mrf.mxu0
      %v1397 = vadd.f32 %v1263, %v1396
      %v1398 = vpop.f32.mrf.mxu0
      %v1399 = vadd.f32 %v1267, %v1398
      %1400 = vmatprep.mubr.f32.mxu0 %v1111
      %1401 = vmatmul.mubr.f32.gmra.mxu0 %v1110
      %v1402 = vpop.f32.mrf.mxu0
      %v1403 = vadd.f32 %v1263, %v1402
      %v1404 = vpop.f32.mrf.mxu0
      %v1405 = vadd.f32 %v1267, %v1404
      %1406 = vmatprep.mubr.f32.mxu0 %v1115
      %1407 = vmatmul.mubr.f32.gmra.mxu0 %v1114
      %v1408 = vpop.f32.mrf.mxu0
      %v1409 = vadd.f32 %v1263, %v1408
      %v1410 = vpop.f32.mrf.mxu0
      %v1411 = vadd.f32 %v1267, %v1410
      %1412 = vmatprep.mubr.f32.mxu0 %v1119
      %1413 = vmatmul.mubr.f32.gmra.mxu0 %v1118
      %v1414 = vpop.f32.mrf.mxu0
      %v1415 = vadd.f32 %v1263, %v1414
      %v1416 = vpop.f32.mrf.mxu0
      %v1417 = vadd.f32 %v1267, %v1416
      %1418 = vmatprep.mubr.f32.mxu0 %v1123
      %1419 = vmatmul.mubr.f32.gmra.mxu0 %v1122
      %v1420 = vpop.f32.mrf.mxu0
      %v1421 = vadd.f32 %v1263, %v1420
      %v1422 = vpop.f32.mrf.mxu0
      %v1423 = vadd.f32 %v1267, %v1422
      %1424 = vmatprep.mubr.f32.mxu0 %v1127
      %1425 = vmatmul.mubr.f32.gmra.mxu0 %v1126
      %v1426 = vpop.f32.mrf.mxu0
      %v1427 = vadd.f32 %v1263, %v1426
      %v1428 = vpop.f32.mrf.mxu0
      %v1429 = vadd.f32 %v1267, %v1428
      %1430 = vdwg.mxu0
      %1431 = vmatprep.subr.mxu0 %v1225
      %1432 = vmatpush1.msra.mxu0 %v1224
      %1433 = vmatprep.subr.mxu0 %v1223
      %1434 = vmatpush1.msra.mxu0 %v1222
      %1435 = vmatprep.subr.mxu0 %v1221
      %1436 = vmatpush1.msra.mxu0 %v1220
      %1437 = vmatprep.subr.mxu0 %v1219
      %1438 = vmatpush1.msra.mxu0 %v1218
      %1439 = vmatprep.subr.mxu0 %v1217
      %1440 = vmatpush1.msra.mxu0 %v1216
      %1441 = vmatprep.subr.mxu0 %v1215
      %1442 = vmatpush1.msra.mxu0 %v1214
      %1443 = vmatprep.subr.mxu0 %v1213
      %1444 = vmatpush1.msra.mxu0 %v1212
      %1445 = vmatprep.subr.mxu0 %v1211
      %1446 = vmatpush1.msra.mxu0 %v1210
      %1447 = vmatprep.subr.mxu0 %v1209
      %1448 = vmatpush1.msra.mxu0 %v1208
      %1449 = vmatprep.subr.mxu0 %v1207
      %1450 = vmatpush1.msra.mxu0 %v1206
      %1451 = vmatprep.subr.mxu0 %v1205
      %1452 = vmatpush1.msra.mxu0 %v1204
      %1453 = vmatprep.subr.mxu0 %v1203
      %1454 = vmatpush1.msra.mxu0 %v1202
      %1455 = vmatprep.subr.mxu0 %v1201
      %1456 = vmatpush1.msra.mxu0 %v1200
      %1457 = vmatprep.subr.mxu0 %v1199
      %1458 = vmatpush1.msra.mxu0 %v1198
      %1459 = vmatprep.subr.mxu0 %v1197
      %1460 = vmatpush1.msra.mxu0 %v1196
      %1461 = vmatprep.subr.mxu0 %v1195
      %1462 = vmatpush1.msra.mxu0 %v1194
      %1463 = vmatprep.subr.mxu0 %v1257
      %1464 = vmatpush2.msra.mxu0 %v1256
      %1465 = vmatprep.subr.mxu0 %v1255
      %1466 = vmatpush2.msra.mxu0 %v1254
      %1467 = vmatprep.subr.mxu0 %v1253
      %1468 = vmatpush2.msra.mxu0 %v1252
      %1469 = vmatprep.subr.mxu0 %v1251
      %1470 = vmatpush2.msra.mxu0 %v1250
      %1471 = vmatprep.subr.mxu0 %v1249
      %1472 = vmatpush2.msra.mxu0 %v1248
      %1473 = vmatprep.subr.mxu0 %v1247
      %1474 = vmatpush2.msra.mxu0 %v1246
      %1475 = vmatprep.subr.mxu0 %v1245
      %1476 = vmatpush2.msra.mxu0 %v1244
      %1477 = vmatprep.subr.mxu0 %v1243
      %1478 = vmatpush2.msra.mxu0 %v1242
      %1479 = vmatprep.subr.mxu0 %v1241
      %1480 = vmatpush2.msra.mxu0 %v1240
      %1481 = vmatprep.subr.mxu0 %v1239
      %1482 = vmatpush2.msra.mxu0 %v1238
      %1483 = vmatprep.subr.mxu0 %v1237
      %1484 = vmatpush2.msra.mxu0 %v1236
      %1485 = vmatprep.subr.mxu0 %v1235
      %1486 = vmatpush2.msra.mxu0 %v1234
      %1487 = vmatprep.subr.mxu0 %v1233
      %1488 = vmatpush2.msra.mxu0 %v1232
      %1489 = vmatprep.subr.mxu0 %v1231
      %1490 = vmatpush2.msra.mxu0 %v1230
      %1491 = vmatprep.subr.mxu0 %v1229
      %1492 = vmatpush2.msra.mxu0 %v1228
      %1493 = vmatprep.subr.mxu0 %v1227
      %1494 = vmatpush2.msra.mxu0 %v1226
      %1495 = vmatprep.mubr.f32.mxu0 %v1069
      %1496 = vmatmul.mubr.f32.gmra.mxu0 %v1068
      %v1497 = vpop.f32.mrf.mxu0
      %v1498 = vadd.f32 %v1337, %v1497
      %v1499 = vpop.f32.mrf.mxu0
      %v1500 = vadd.f32 %v1339, %v1499
      %1501 = vmatprep.mubr.f32.mxu0 %v1073
      %1502 = vmatmul.mubr.f32.gmra.mxu0 %v1072
      %v1503 = vpop.f32.mrf.mxu0
      %v1504 = vadd.f32 %v1343, %v1503
      %v1505 = vpop.f32.mrf.mxu0
      %v1506 = vadd.f32 %v1345, %v1505
      %1507 = vmatprep.mubr.f32.mxu0 %v1077
      %1508 = vmatmul.mubr.f32.gmra.mxu0 %v1076
      %v1509 = vpop.f32.mrf.mxu0
      %v1510 = vadd.f32 %v1349, %v1509
      %v1511 = vpop.f32.mrf.mxu0
      %v1512 = vadd.f32 %v1351, %v1511
      %1513 = vmatprep.mubr.f32.mxu0 %v1081
      %1514 = vmatmul.mubr.f32.gmra.mxu0 %v1080
      %v1515 = vpop.f32.mrf.mxu0
      %v1516 = vadd.f32 %v1355, %v1515
      %v1517 = vpop.f32.mrf.mxu0
      %v1518 = vadd.f32 %v1357, %v1517
      %1519 = vmatprep.mubr.f32.mxu0 %v1085
      %1520 = vmatmul.mubr.f32.gmra.mxu0 %v1084
      %v1521 = vpop.f32.mrf.mxu0
      %v1522 = vadd.f32 %v1361, %v1521
      %v1523 = vpop.f32.mrf.mxu0
      %v1524 = vadd.f32 %v1363, %v1523
      %1525 = vmatprep.mubr.f32.mxu0 %v1089
      %1526 = vmatmul.mubr.f32.gmra.mxu0 %v1088
      %v1527 = vpop.f32.mrf.mxu0
      %v1528 = vadd.f32 %v1367, %v1527
      %v1529 = vpop.f32.mrf.mxu0
      %v1530 = vadd.f32 %v1369, %v1529
      %1531 = vmatprep.mubr.f32.mxu0 %v1093
      %1532 = vmatmul.mubr.f32.gmra.mxu0 %v1092
      %v1533 = vpop.f32.mrf.mxu0
      %v1534 = vadd.f32 %v1373, %v1533
      %v1535 = vpop.f32.mrf.mxu0
      %v1536 = vadd.f32 %v1375, %v1535
      %1537 = vmatprep.mubr.f32.mxu0 %v1097
      %1538 = vmatmul.mubr.f32.gmra.mxu0 %v1096
      %v1539 = vpop.f32.mrf.mxu0
      %v1540 = vadd.f32 %v1379, %v1539
      %v1541 = vpop.f32.mrf.mxu0
      %v1542 = vadd.f32 %v1381, %v1541
      %1543 = vmatprep.mubr.f32.mxu0 %v1101
      %1544 = vmatmul.mubr.f32.gmra.mxu0 %v1100
      %v1545 = vpop.f32.mrf.mxu0
      %v1546 = vadd.f32 %v1385, %v1545
      %v1547 = vpop.f32.mrf.mxu0
      %v1548 = vadd.f32 %v1387, %v1547
      %1549 = vmatprep.mubr.f32.mxu0 %v1105
      %1550 = vmatmul.mubr.f32.gmra.mxu0 %v1104
      %v1551 = vpop.f32.mrf.mxu0
      %v1552 = vadd.f32 %v1391, %v1551
      %v1553 = vpop.f32.mrf.mxu0
      %v1554 = vadd.f32 %v1393, %v1553
      %1555 = vmatprep.mubr.f32.mxu0 %v1109
      %1556 = vmatmul.mubr.f32.gmra.mxu0 %v1108
      %v1557 = vpop.f32.mrf.mxu0
      %v1558 = vadd.f32 %v1397, %v1557
      %v1559 = vpop.f32.mrf.mxu0
      %v1560 = vadd.f32 %v1399, %v1559
      %1561 = vmatprep.mubr.f32.mxu0 %v1113
      %1562 = vmatmul.mubr.f32.gmra.mxu0 %v1112
      %v1563 = vpop.f32.mrf.mxu0
      %v1564 = vadd.f32 %v1403, %v1563
      %v1565 = vpop.f32.mrf.mxu0
      %v1566 = vadd.f32 %v1405, %v1565
      %1567 = vmatprep.mubr.f32.mxu0 %v1117
      %1568 = vmatmul.mubr.f32.gmra.mxu0 %v1116
      %v1569 = vpop.f32.mrf.mxu0
      %v1570 = vadd.f32 %v1409, %v1569
      %v1571 = vpop.f32.mrf.mxu0
      %v1572 = vadd.f32 %v1411, %v1571
      %1573 = vmatprep.mubr.f32.mxu0 %v1121
      %1574 = vmatmul.mubr.f32.gmra.mxu0 %v1120
      %v1575 = vpop.f32.mrf.mxu0
      %v1576 = vadd.f32 %v1415, %v1575
      %v1577 = vpop.f32.mrf.mxu0
      %v1578 = vadd.f32 %v1417, %v1577
      %1579 = vmatprep.mubr.f32.mxu0 %v1125
      %1580 = vmatmul.mubr.f32.gmra.mxu0 %v1124
      %v1581 = vpop.f32.mrf.mxu0
      %v1582 = vadd.f32 %v1421, %v1581
      %v1583 = vpop.f32.mrf.mxu0
      %v1584 = vadd.f32 %v1423, %v1583
      %1585 = vmatprep.mubr.f32.mxu0 %v1129
      %1586 = vmatmul.mubr.f32.gmra.mxu0 %v1128
      %v1587 = vpop.f32.mrf.mxu0
      %v1588 = vadd.f32 %v1427, %v1587
      %v1589 = vpop.f32.mrf.mxu0
      %v1590 = vadd.f32 %v1429, %v1589
      %1591 = vdwg.mxu0
      %v1592 = vmax.f32 %v1498, 0.0
      %v1593 = vmax.f32 %v1500, 0.0
      %v1594 = vmax.f32 %v1504, 0.0
      %v1595 = vmax.f32 %v1506, 0.0
      %v1596 = vmax.f32 %v1510, 0.0
      %v1597 = vmax.f32 %v1512, 0.0
      %v1598 = vmax.f32 %v1516, 0.0
      %v1599 = vmax.f32 %v1518, 0.0
      %v1600 = vmax.f32 %v1522, 0.0
      %v1601 = vmax.f32 %v1524, 0.0
      %v1602 = vmax.f32 %v1528, 0.0
      %v1603 = vmax.f32 %v1530, 0.0
      %v1604 = vmax.f32 %v1534, 0.0
      %v1605 = vmax.f32 %v1536, 0.0
      %v1606 = vmax.f32 %v1540, 0.0
      %v1607 = vmax.f32 %v1542, 0.0
      %v1608 = vmax.f32 %v1546, 0.0
      %v1609 = vmax.f32 %v1548, 0.0
      %v1610 = vmax.f32 %v1552, 0.0
      %v1611 = vmax.f32 %v1554, 0.0
      %v1612 = vmax.f32 %v1558, 0.0
      %v1613 = vmax.f32 %v1560, 0.0
      %v1614 = vmax.f32 %v1564, 0.0
      %v1615 = vmax.f32 %v1566, 0.0
      %v1616 = vmax.f32 %v1570, 0.0
      %v1617 = vmax.f32 %v1572, 0.0
      %v1618 = vmax.f32 %v1576, 0.0
      %v1619 = vmax.f32 %v1578, 0.0
      %v1620 = vmax.f32 %v1582, 0.0
      %v1621 = vmax.f32 %v1584, 0.0
      %v1622 = vmax.f32 %v1588, 0.0
      %v1623 = vmax.f32 %v1590, 0.0
      %v1624 = vld [vmem:[%s6] sm:$0xff]
      %v1625 = vld [vmem:[%s6 + $0x8] sm:$0xff]
      %v1626 = vld [vmem:[%s6 + $0x10] sm:$0xff]
      %v1627 = vld [vmem:[%s6 + $0x18] sm:$0xff]
      %v1628 = vld [vmem:[%s6 + $0x20] sm:$0xff]
      %v1629 = vld [vmem:[%s6 + $0x28] sm:$0xff]
      %v1630 = vld [vmem:[%s6 + $0x30] sm:$0xff]
      %v1631 = vld [vmem:[%s6 + $0x38] sm:$0xff]
      %v1632 = vld [vmem:[%s6 + $0x40] sm:$0xff]
      %v1633 = vld [vmem:[%s6 + $0x48] sm:$0xff]
      %v1634 = vld [vmem:[%s6 + $0x50] sm:$0xff]
      %v1635 = vld [vmem:[%s6 + $0x58] sm:$0xff]
      %v1636 = vld [vmem:[%s6 + $0x60] sm:$0xff]
      %v1637 = vld [vmem:[%s6 + $0x68] sm:$0xff]
      %v1638 = vld [vmem:[%s6 + $0x70] sm:$0xff]
      %v1639 = vld [vmem:[%s6 + $0x78] sm:$0xff]
      %v1640 = vld [vmem:[%s6 + $0x80] sm:$0xff]
      %v1641 = vld [vmem:[%s6 + $0x88] sm:$0xff]
      %v1642 = vld [vmem:[%s6 + $0x90] sm:$0xff]
      %v1643 = vld [vmem:[%s6 + $0x98] sm:$0xff]
      %v1644 = vld [vmem:[%s6 + $0xa0] sm:$0xff]
      %v1645 = vld [vmem:[%s6 + $0xa8] sm:$0xff]
      %v1646 = vld [vmem:[%s6 + $0xb0] sm:$0xff]
      %v1647 = vld [vmem:[%s6 + $0xb8] sm:$0xff]
      %v1648 = vld [vmem:[%s6 + $0xc0] sm:$0xff]
      %v1649 = vld [vmem:[%s6 + $0xc8] sm:$0xff]
      %v1650 = vld [vmem:[%s6 + $0xd0] sm:$0xff]
      %v1651 = vld [vmem:[%s6 + $0xd8] sm:$0xff]
      %v1652 = vld [vmem:[%s6 + $0xe0] sm:$0xff]
      %v1653 = vld [vmem:[%s6 + $0xe8] sm:$0xff]
      %v1654 = vld [vmem:[%s6 + $0xf0] sm:$0xff]
      %v1655 = vld [vmem:[%s6 + $0xf8] sm:$0xff]
      %v1656 = vld [vmem:[%s7] sm:$0xff]
      %v1657 = vld [vmem:[%s7 + $0x8] sm:$0xff]
      %v1658 = vld [vmem:[%s7 + $0x10] sm:$0xff]
      %v1659 = vld [vmem:[%s7 + $0x18] sm:$0xff]
      %v1660 = vld [vmem:[%s7 + $0x20] sm:$0xff]
      %v1661 = vld [vmem:[%s7 + $0x28] sm:$0xff]
      %v1662 = vld [vmem:[%s7 + $0x30] sm:$0xff]
      %v1663 = vld [vmem:[%s7 + $0x38] sm:$0xff]
      %v1664 = vld [vmem:[%s7 + $0x40] sm:$0xff]
      %v1665 = vld [vmem:[%s7 + $0x48] sm:$0xff]
      %v1666 = vld [vmem:[%s7 + $0x50] sm:$0xff]
      %v1667 = vld [vmem:[%s7 + $0x58] sm:$0xff]
      %v1668 = vld [vmem:[%s7 + $0x60] sm:$0xff]
      %v1669 = vld [vmem:[%s7 + $0x68] sm:$0xff]
      %v1670 = vld [vmem:[%s7 + $0x70] sm:$0xff]
      %v1671 = vld [vmem:[%s7 + $0x78] sm:$0xff]
      %v1672 = vld [vmem:[%s7 + $0x80] sm:$0xff]
      %v1673 = vld [vmem:[%s7 + $0x88] sm:$0xff]
      %v1674 = vld [vmem:[%s7 + $0x90] sm:$0xff]
      %v1675 = vld [vmem:[%s7 + $0x98] sm:$0xff]
      %v1676 = vld [vmem:[%s7 + $0xa0] sm:$0xff]
      %v1677 = vld [vmem:[%s7 + $0xa8] sm:$0xff]
      %v1678 = vld [vmem:[%s7 + $0xb0] sm:$0xff]
      %v1679 = vld [vmem:[%s7 + $0xb8] sm:$0xff]
      %v1680 = vld [vmem:[%s7 + $0xc0] sm:$0xff]
      %v1681 = vld [vmem:[%s7 + $0xc8] sm:$0xff]
      %v1682 = vld [vmem:[%s7 + $0xd0] sm:$0xff]
      %v1683 = vld [vmem:[%s7 + $0xd8] sm:$0xff]
      %v1684 = vld [vmem:[%s7 + $0xe0] sm:$0xff]
      %v1685 = vld [vmem:[%s7 + $0xe8] sm:$0xff]
      %v1686 = vld [vmem:[%s7 + $0xf0] sm:$0xff]
      %v1687 = vld [vmem:[%s7 + $0xf8] sm:$0xff]
      %1688 = vmatprep.subr.mxu0 0.0
      %1689 = vmatpush1.msra.mxu0 %v1671
      %1690 = vmatprep.subr.mxu0 0.0
      %1691 = vmatpush1.msra.mxu0 %v1670
      %1692 = vmatprep.subr.mxu0 0.0
      %1693 = vmatpush1.msra.mxu0 %v1669
      %1694 = vmatprep.subr.mxu0 0.0
      %1695 = vmatpush1.msra.mxu0 %v1668
      %1696 = vmatprep.subr.mxu0 0.0
      %1697 = vmatpush1.msra.mxu0 %v1667
      %1698 = vmatprep.subr.mxu0 0.0
      %1699 = vmatpush1.msra.mxu0 %v1666
      %1700 = vmatprep.subr.mxu0 0.0
      %1701 = vmatpush1.msra.mxu0 %v1665
      %1702 = vmatprep.subr.mxu0 0.0
      %1703 = vmatpush1.msra.mxu0 %v1664
      %1704 = vmatprep.subr.mxu0 0.0
      %1705 = vmatpush1.msra.mxu0 %v1663
      %1706 = vmatprep.subr.mxu0 0.0
      %1707 = vmatpush1.msra.mxu0 %v1662
      %1708 = vmatprep.subr.mxu0 0.0
      %1709 = vmatpush1.msra.mxu0 %v1661
      %1710 = vmatprep.subr.mxu0 0.0
      %1711 = vmatpush1.msra.mxu0 %v1660
      %1712 = vmatprep.subr.mxu0 0.0
      %1713 = vmatpush1.msra.mxu0 %v1659
      %1714 = vmatprep.subr.mxu0 0.0
      %1715 = vmatpush1.msra.mxu0 %v1658
      %1716 = vmatprep.subr.mxu0 0.0
      %1717 = vmatpush1.msra.mxu0 %v1657
      %1718 = vmatprep.subr.mxu0 0.0
      %1719 = vmatpush1.msra.mxu0 %v1656
      %1720 = vmatprep.subr.mxu0 0.0
      %1721 = vmatpush2.msra.mxu0 %v1687
      %1722 = vmatprep.subr.mxu0 0.0
      %1723 = vmatpush2.msra.mxu0 %v1686
      %1724 = vmatprep.subr.mxu0 0.0
      %1725 = vmatpush2.msra.mxu0 %v1685
      %1726 = vmatprep.subr.mxu0 0.0
      %1727 = vmatpush2.msra.mxu0 %v1684
      %1728 = vmatprep.subr.mxu0 0.0
      %1729 = vmatpush2.msra.mxu0 %v1683
      %1730 = vmatprep.subr.mxu0 0.0
      %1731 = vmatpush2.msra.mxu0 %v1682
      %1732 = vmatprep.subr.mxu0 0.0
      %1733 = vmatpush2.msra.mxu0 %v1681
      %1734 = vmatprep.subr.mxu0 0.0
      %1735 = vmatpush2.msra.mxu0 %v1680
      %1736 = vmatprep.subr.mxu0 0.0
      %1737 = vmatpush2.msra.mxu0 %v1679
      %1738 = vmatprep.subr.mxu0 0.0
      %1739 = vmatpush2.msra.mxu0 %v1678
      %1740 = vmatprep.subr.mxu0 0.0
      %1741 = vmatpush2.msra.mxu0 %v1677
      %1742 = vmatprep.subr.mxu0 0.0
      %1743 = vmatpush2.msra.mxu0 %v1676
      %1744 = vmatprep.subr.mxu0 0.0
      %1745 = vmatpush2.msra.mxu0 %v1675
      %1746 = vmatprep.subr.mxu0 0.0
      %1747 = vmatpush2.msra.mxu0 %v1674
      %1748 = vmatprep.subr.mxu0 0.0
      %1749 = vmatpush2.msra.mxu0 %v1673
      %1750 = vmatprep.subr.mxu0 0.0
      %1751 = vmatpush2.msra.mxu0 %v1672
      %1752 = vmatprep.mubr.f32.mxu0 %v1593
      %1753 = vmatmul.mubr.f32.gmra.mxu0 %v1592
      %v1754 = vpop.f32.mrf.mxu0
      %v1755 = vadd.f32 0.0, %v1754
      %v1756 = vpop.f32.mrf.mxu0
      %1757 = vmatprep.mubr.f32.mxu0 %v1595
      %1758 = vmatmul.mubr.f32.gmra.mxu0 %v1594
      %v1759 = vpop.f32.mrf.mxu0
      %v1760 = vadd.f32 0.0, %v1759
      %v1761 = vpop.f32.mrf.mxu0
      %1762 = vmatprep.mubr.f32.mxu0 %v1597
      %1763 = vmatmul.mubr.f32.gmra.mxu0 %v1596
      %v1764 = vpop.f32.mrf.mxu0
      %v1765 = vadd.f32 0.0, %v1764
      %v1766 = vpop.f32.mrf.mxu0
      %1767 = vmatprep.mubr.f32.mxu0 %v1599
      %1768 = vmatmul.mubr.f32.gmra.mxu0 %v1598
      %v1769 = vpop.f32.mrf.mxu0
      %v1770 = vadd.f32 0.0, %v1769
      %v1771 = vpop.f32.mrf.mxu0
      %1772 = vmatprep.mubr.f32.mxu0 %v1601
      %1773 = vmatmul.mubr.f32.gmra.mxu0 %v1600
      %v1774 = vpop.f32.mrf.mxu0
      %v1775 = vadd.f32 0.0, %v1774
      %v1776 = vpop.f32.mrf.mxu0
      %1777 = vmatprep.mubr.f32.mxu0 %v1603
      %1778 = vmatmul.mubr.f32.gmra.mxu0 %v1602
      %v1779 = vpop.f32.mrf.mxu0
      %v1780 = vadd.f32 0.0, %v1779
      %v1781 = vpop.f32.mrf.mxu0
      %1782 = vmatprep.mubr.f32.mxu0 %v1605
      %1783 = vmatmul.mubr.f32.gmra.mxu0 %v1604
      %v1784 = vpop.f32.mrf.mxu0
      %v1785 = vadd.f32 0.0, %v1784
      %v1786 = vpop.f32.mrf.mxu0
      %1787 = vmatprep.mubr.f32.mxu0 %v1607
      %1788 = vmatmul.mubr.f32.gmra.mxu0 %v1606
      %v1789 = vpop.f32.mrf.mxu0
      %v1790 = vadd.f32 0.0, %v1789
      %v1791 = vpop.f32.mrf.mxu0
      %1792 = vmatprep.mubr.f32.mxu0 %v1609
      %1793 = vmatmul.mubr.f32.gmra.mxu0 %v1608
      %v1794 = vpop.f32.mrf.mxu0
      %v1795 = vadd.f32 0.0, %v1794
      %v1796 = vpop.f32.mrf.mxu0
      %1797 = vmatprep.mubr.f32.mxu0 %v1611
      %1798 = vmatmul.mubr.f32.gmra.mxu0 %v1610
      %v1799 = vpop.f32.mrf.mxu0
      %v1800 = vadd.f32 0.0, %v1799
      %v1801 = vpop.f32.mrf.mxu0
      %1802 = vmatprep.mubr.f32.mxu0 %v1613
      %1803 = vmatmul.mubr.f32.gmra.mxu0 %v1612
      %v1804 = vpop.f32.mrf.mxu0
      %v1805 = vadd.f32 0.0, %v1804
      %v1806 = vpop.f32.mrf.mxu0
      %1807 = vmatprep.mubr.f32.mxu0 %v1615
      %1808 = vmatmul.mubr.f32.gmra.mxu0 %v1614
      %v1809 = vpop.f32.mrf.mxu0
      %v1810 = vadd.f32 0.0, %v1809
      %v1811 = vpop.f32.mrf.mxu0
      %1812 = vmatprep.mubr.f32.mxu0 %v1617
      %1813 = vmatmul.mubr.f32.gmra.mxu0 %v1616
      %v1814 = vpop.f32.mrf.mxu0
      %v1815 = vadd.f32 0.0, %v1814
      %v1816 = vpop.f32.mrf.mxu0
      %1817 = vmatprep.mubr.f32.mxu0 %v1619
      %1818 = vmatmul.mubr.f32.gmra.mxu0 %v1618
      %v1819 = vpop.f32.mrf.mxu0
      %v1820 = vadd.f32 0.0, %v1819
      %v1821 = vpop.f32.mrf.mxu0
      %1822 = vmatprep.mubr.f32.mxu0 %v1621
      %1823 = vmatmul.mubr.f32.gmra.mxu0 %v1620
      %v1824 = vpop.f32.mrf.mxu0
      %v1825 = vadd.f32 0.0, %v1824
      %v1826 = vpop.f32.mrf.mxu0
      %1827 = vmatprep.mubr.f32.mxu0 %v1623
      %1828 = vmatmul.mubr.f32.gmra.mxu0 %v1622
      %v1829 = vpop.f32.mrf.mxu0
      %v1830 = vadd.f32 0.0, %v1829
      %v1831 = vpop.f32.mrf.mxu0
      %1832 = vdwg.mxu0
      %1833 = vmatprep.subr.mxu0 0.0
      %1834 = vmatpush1.msra.mxu0 %v1639
      %1835 = vmatprep.subr.mxu0 0.0
      %1836 = vmatpush1.msra.mxu0 %v1638
      %1837 = vmatprep.subr.mxu0 0.0
      %1838 = vmatpush1.msra.mxu0 %v1637
      %1839 = vmatprep.subr.mxu0 0.0
      %1840 = vmatpush1.msra.mxu0 %v1636
      %1841 = vmatprep.subr.mxu0 0.0
      %1842 = vmatpush1.msra.mxu0 %v1635
      %1843 = vmatprep.subr.mxu0 0.0
      %1844 = vmatpush1.msra.mxu0 %v1634
      %1845 = vmatprep.subr.mxu0 0.0
      %1846 = vmatpush1.msra.mxu0 %v1633
      %1847 = vmatprep.subr.mxu0 0.0
      %1848 = vmatpush1.msra.mxu0 %v1632
      %1849 = vmatprep.subr.mxu0 0.0
      %1850 = vmatpush1.msra.mxu0 %v1631
      %1851 = vmatprep.subr.mxu0 0.0
      %1852 = vmatpush1.msra.mxu0 %v1630
      %1853 = vmatprep.subr.mxu0 0.0
      %1854 = vmatpush1.msra.mxu0 %v1629
      %1855 = vmatprep.subr.mxu0 0.0
      %1856 = vmatpush1.msra.mxu0 %v1628
      %1857 = vmatprep.subr.mxu0 0.0
      %1858 = vmatpush1.msra.mxu0 %v1627
      %1859 = vmatprep.subr.mxu0 0.0
      %1860 = vmatpush1.msra.mxu0 %v1626
      %1861 = vmatprep.subr.mxu0 0.0
      %1862 = vmatpush1.msra.mxu0 %v1625
      %1863 = vmatprep.subr.mxu0 0.0
      %1864 = vmatpush1.msra.mxu0 %v1624
      %1865 = vmatprep.subr.mxu0 0.0
      %1866 = vmatpush2.msra.mxu0 %v1655
      %1867 = vmatprep.subr.mxu0 0.0
      %1868 = vmatpush2.msra.mxu0 %v1654
      %1869 = vmatprep.subr.mxu0 0.0
      %1870 = vmatpush2.msra.mxu0 %v1653
      %1871 = vmatprep.subr.mxu0 0.0
      %1872 = vmatpush2.msra.mxu0 %v1652
      %1873 = vmatprep.subr.mxu0 0.0
      %1874 = vmatpush2.msra.mxu0 %v1651
      %1875 = vmatprep.subr.mxu0 0.0
      %1876 = vmatpush2.msra.mxu0 %v1650
      %1877 = vmatprep.subr.mxu0 0.0
      %1878 = vmatpush2.msra.mxu0 %v1649
      %1879 = vmatprep.subr.mxu0 0.0
      %1880 = vmatpush2.msra.mxu0 %v1648
      %1881 = vmatprep.subr.mxu0 0.0
      %1882 = vmatpush2.msra.mxu0 %v1647
      %1883 = vmatprep.subr.mxu0 0.0
      %1884 = vmatpush2.msra.mxu0 %v1646
      %1885 = vmatprep.subr.mxu0 0.0
      %1886 = vmatpush2.msra.mxu0 %v1645
      %1887 = vmatprep.subr.mxu0 0.0
      %1888 = vmatpush2.msra.mxu0 %v1644
      %1889 = vmatprep.subr.mxu0 0.0
      %1890 = vmatpush2.msra.mxu0 %v1643
      %1891 = vmatprep.subr.mxu0 0.0
      %1892 = vmatpush2.msra.mxu0 %v1642
      %1893 = vmatprep.subr.mxu0 0.0
      %1894 = vmatpush2.msra.mxu0 %v1641
      %1895 = vmatprep.subr.mxu0 0.0
      %1896 = vmatpush2.msra.mxu0 %v1640
      %1897 = vmatprep.mubr.f32.mxu0 %v1035
      %1898 = vmatmul.mubr.f32.gmra.mxu0 %v1034
      %v1899 = vpop.f32.mrf.mxu0
      %v1900 = vadd.f32 %v1755, %v1899
      %v1901 = vpop.f32.mrf.mxu0
      %1902 = vmatprep.mubr.f32.mxu0 %v1037
      %1903 = vmatmul.mubr.f32.gmra.mxu0 %v1036
      %v1904 = vpop.f32.mrf.mxu0
      %v1905 = vadd.f32 %v1760, %v1904
      %v1906 = vpop.f32.mrf.mxu0
      %1907 = vmatprep.mubr.f32.mxu0 %v1039
      %1908 = vmatmul.mubr.f32.gmra.mxu0 %v1038
      %v1909 = vpop.f32.mrf.mxu0
      %v1910 = vadd.f32 %v1765, %v1909
      %v1911 = vpop.f32.mrf.mxu0
      %1912 = vmatprep.mubr.f32.mxu0 %v1041
      %1913 = vmatmul.mubr.f32.gmra.mxu0 %v1040
      %v1914 = vpop.f32.mrf.mxu0
      %v1915 = vadd.f32 %v1770, %v1914
      %v1916 = vpop.f32.mrf.mxu0
      %1917 = vmatprep.mubr.f32.mxu0 %v1043
      %1918 = vmatmul.mubr.f32.gmra.mxu0 %v1042
      %v1919 = vpop.f32.mrf.mxu0
      %v1920 = vadd.f32 %v1775, %v1919
      %v1921 = vpop.f32.mrf.mxu0
      %1922 = vmatprep.mubr.f32.mxu0 %v1045
      %1923 = vmatmul.mubr.f32.gmra.mxu0 %v1044
      %v1924 = vpop.f32.mrf.mxu0
      %v1925 = vadd.f32 %v1780, %v1924
      %v1926 = vpop.f32.mrf.mxu0
      %1927 = vmatprep.mubr.f32.mxu0 %v1047
      %1928 = vmatmul.mubr.f32.gmra.mxu0 %v1046
      %v1929 = vpop.f32.mrf.mxu0
      %v1930 = vadd.f32 %v1785, %v1929
      %v1931 = vpop.f32.mrf.mxu0
      %1932 = vmatprep.mubr.f32.mxu0 %v1049
      %1933 = vmatmul.mubr.f32.gmra.mxu0 %v1048
      %v1934 = vpop.f32.mrf.mxu0
      %v1935 = vadd.f32 %v1790, %v1934
      %v1936 = vpop.f32.mrf.mxu0
      %1937 = vmatprep.mubr.f32.mxu0 %v1051
      %1938 = vmatmul.mubr.f32.gmra.mxu0 %v1050
      %v1939 = vpop.f32.mrf.mxu0
      %v1940 = vadd.f32 %v1795, %v1939
      %v1941 = vpop.f32.mrf.mxu0
      %1942 = vmatprep.mubr.f32.mxu0 %v1053
      %1943 = vmatmul.mubr.f32.gmra.mxu0 %v1052
      %v1944 = vpop.f32.mrf.mxu0
      %v1945 = vadd.f32 %v1800, %v1944
      %v1946 = vpop.f32.mrf.mxu0
      %1947 = vmatprep.mubr.f32.mxu0 %v1055
      %1948 = vmatmul.mubr.f32.gmra.mxu0 %v1054
      %v1949 = vpop.f32.mrf.mxu0
      %v1950 = vadd.f32 %v1805, %v1949
      %v1951 = vpop.f32.mrf.mxu0
      %1952 = vmatprep.mubr.f32.mxu0 %v1057
      %1953 = vmatmul.mubr.f32.gmra.mxu0 %v1056
      %v1954 = vpop.f32.mrf.mxu0
      %v1955 = vadd.f32 %v1810, %v1954
      %v1956 = vpop.f32.mrf.mxu0
      %1957 = vmatprep.mubr.f32.mxu0 %v1059
      %1958 = vmatmul.mubr.f32.gmra.mxu0 %v1058
      %v1959 = vpop.f32.mrf.mxu0
      %v1960 = vadd.f32 %v1815, %v1959
      %v1961 = vpop.f32.mrf.mxu0
      %1962 = vmatprep.mubr.f32.mxu0 %v1061
      %1963 = vmatmul.mubr.f32.gmra.mxu0 %v1060
      %v1964 = vpop.f32.mrf.mxu0
      %v1965 = vadd.f32 %v1820, %v1964
      %v1966 = vpop.f32.mrf.mxu0
      %1967 = vmatprep.mubr.f32.mxu0 %v1063
      %1968 = vmatmul.mubr.f32.gmra.mxu0 %v1062
      %v1969 = vpop.f32.mrf.mxu0
      %v1970 = vadd.f32 %v1825, %v1969
      %v1971 = vpop.f32.mrf.mxu0
      %1972 = vmatprep.mubr.f32.mxu0 %v1065
      %1973 = vmatmul.mubr.f32.gmra.mxu0 %v1064
      %v1974 = vpop.f32.mrf.mxu0
      %v1975 = vadd.f32 %v1830, %v1974
      %v1976 = vpop.f32.mrf.mxu0
      %1977 = vdwg.mxu0
      %v1978 = vld [vmem:[%s8] sm:$0x1]
      %v1980 = vlaneseq
      %v1981 = vshrl.u32 %v1980, 7
      %v1982 = vsub.s32 0, %v1981
      %v1983 = vrot.slane %v1978, %v1982
      %v1985 = vadd.f32 %v1900, %v1983
      %v1986 = vadd.f32 %v1905, %v1983
      %v1987 = vadd.f32 %v1910, %v1983
      %v1988 = vadd.f32 %v1915, %v1983
      %v1989 = vadd.f32 %v1920, %v1983
      %v1990 = vadd.f32 %v1925, %v1983
      %v1991 = vadd.f32 %v1930, %v1983
      %v1992 = vadd.f32 %v1935, %v1983
      %v1993 = vadd.f32 %v1940, %v1983
      %v1994 = vadd.f32 %v1945, %v1983
      %v1995 = vadd.f32 %v1950, %v1983
      %v1996 = vadd.f32 %v1955, %v1983
      %v1997 = vadd.f32 %v1960, %v1983
      %v1998 = vadd.f32 %v1965, %v1983
      %v1999 = vadd.f32 %v1970, %v1983
      %v2000 = vadd.f32 %v1975, %v1983
      %v2001 = vmax.f32 %v1985, 0.0
      %v2002 = vmax.f32 %v1986, 0.0
      %v2003 = vmax.f32 %v1987, 0.0
      %v2004 = vmax.f32 %v1988, 0.0
      %v2005 = vmax.f32 %v1989, 0.0
      %v2006 = vmax.f32 %v1990, 0.0
      %v2007 = vmax.f32 %v1991, 0.0
      %v2008 = vmax.f32 %v1992, 0.0
      %v2009 = vmax.f32 %v1993, 0.0
      %v2010 = vmax.f32 %v1994, 0.0
      %v2011 = vmax.f32 %v1995, 0.0
      %v2012 = vmax.f32 %v1996, 0.0
      %v2013 = vmax.f32 %v1997, 0.0
      %v2014 = vmax.f32 %v1998, 0.0
      %v2015 = vmax.f32 %v1999, 0.0
      %v2016 = vmax.f32 %v2000, 0.0
      %v2017 = vld [vmem:[%s9] sm:$0xff]
      %v2018 = vld [vmem:[%s9 + $0x8] sm:$0xff]
      %v2019 = vld [vmem:[%s9 + $0x10] sm:$0xff]
      %v2020 = vld [vmem:[%s9 + $0x18] sm:$0xff]
      %v2021 = vld [vmem:[%s9 + $0x20] sm:$0xff]
      %v2022 = vld [vmem:[%s9 + $0x28] sm:$0xff]
      %v2023 = vld [vmem:[%s9 + $0x30] sm:$0xff]
      %v2024 = vld [vmem:[%s9 + $0x38] sm:$0xff]
      %v2025 = vld [vmem:[%s9 + $0x40] sm:$0xff]
      %v2026 = vld [vmem:[%s9 + $0x48] sm:$0xff]
      %v2027 = vld [vmem:[%s9 + $0x50] sm:$0xff]
      %v2028 = vld [vmem:[%s9 + $0x58] sm:$0xff]
      %v2029 = vld [vmem:[%s9 + $0x60] sm:$0xff]
      %v2030 = vld [vmem:[%s9 + $0x68] sm:$0xff]
      %v2031 = vld [vmem:[%s9 + $0x70] sm:$0xff]
      %v2032 = vld [vmem:[%s9 + $0x78] sm:$0xff]
      %v2033 = vld [vmem:[%s10] sm:$0x1]
      %v2035 = vlaneseq
      %v2036 = vshrl.u32 %v2035, 7
      %v2037 = vsub.s32 0, %v2036
      %v2038 = vrot.slane %v2033, %v2037
      %2040 = vmatprep.subr.mxu0 0.0
      %2041 = vmatpush1.msra.mxu0 %v2032
      %2042 = vmatprep.subr.mxu0 0.0
      %2043 = vmatpush1.msra.mxu0 %v2031
      %2044 = vmatprep.subr.mxu0 0.0
      %2045 = vmatpush1.msra.mxu0 %v2030
      %2046 = vmatprep.subr.mxu0 0.0
      %2047 = vmatpush1.msra.mxu0 %v2029
      %2048 = vmatprep.subr.mxu0 0.0
      %2049 = vmatpush1.msra.mxu0 %v2028
      %2050 = vmatprep.subr.mxu0 0.0
      %2051 = vmatpush1.msra.mxu0 %v2027
      %2052 = vmatprep.subr.mxu0 0.0
      %2053 = vmatpush1.msra.mxu0 %v2026
      %2054 = vmatprep.subr.mxu0 0.0
      %2055 = vmatpush1.msra.mxu0 %v2025
      %2056 = vmatprep.subr.mxu0 0.0
      %2057 = vmatpush1.msra.mxu0 %v2024
      %2058 = vmatprep.subr.mxu0 0.0
      %2059 = vmatpush1.msra.mxu0 %v2023
      %2060 = vmatprep.subr.mxu0 0.0
      %2061 = vmatpush1.msra.mxu0 %v2022
      %2062 = vmatprep.subr.mxu0 0.0
      %2063 = vmatpush1.msra.mxu0 %v2021
      %2064 = vmatprep.subr.mxu0 0.0
      %2065 = vmatpush1.msra.mxu0 %v2020
      %2066 = vmatprep.subr.mxu0 0.0
      %2067 = vmatpush1.msra.mxu0 %v2019
      %2068 = vmatprep.subr.mxu0 0.0
      %2069 = vmatpush1.msra.mxu0 %v2018
      %2070 = vmatprep.subr.mxu0 0.0
      %2071 = vmatpush1.msra.mxu0 %v2017
      %2072 = vmatprep.subr.mxu0 0.0
      %2073 = vmatpush2.msra.mxu0 0.0
      %2074 = vmatprep.subr.mxu0 0.0
      %2075 = vmatpush2.msra.mxu0 0.0
      %2076 = vmatprep.subr.mxu0 0.0
      %2077 = vmatpush2.msra.mxu0 0.0
      %2078 = vmatprep.subr.mxu0 0.0
      %2079 = vmatpush2.msra.mxu0 0.0
      %2080 = vmatprep.subr.mxu0 0.0
      %2081 = vmatpush2.msra.mxu0 0.0
      %2082 = vmatprep.subr.mxu0 0.0
      %2083 = vmatpush2.msra.mxu0 0.0
      %2084 = vmatprep.subr.mxu0 0.0
      %2085 = vmatpush2.msra.mxu0 0.0
      %2086 = vmatprep.subr.mxu0 0.0
      %2087 = vmatpush2.msra.mxu0 0.0
      %2088 = vmatprep.subr.mxu0 0.0
      %2089 = vmatpush2.msra.mxu0 0.0
      %2090 = vmatprep.subr.mxu0 0.0
      %2091 = vmatpush2.msra.mxu0 0.0
      %2092 = vmatprep.subr.mxu0 0.0
      %2093 = vmatpush2.msra.mxu0 0.0
      %2094 = vmatprep.subr.mxu0 0.0
      %2095 = vmatpush2.msra.mxu0 0.0
      %2096 = vmatprep.subr.mxu0 0.0
      %2097 = vmatpush2.msra.mxu0 0.0
      %2098 = vmatprep.subr.mxu0 0.0
      %2099 = vmatpush2.msra.mxu0 0.0
      %2100 = vmatprep.subr.mxu0 0.0
      %2101 = vmatpush2.msra.mxu0 0.0
      %2102 = vmatprep.subr.mxu0 0.0
      %2103 = vmatpush2.msra.mxu0 0.0
      %2104 = vmatprep.mubr.f32.mxu0 0.0
      %2105 = vmatmul.mubr.f32.gmra.mxu0 %v2001
      %v2106 = vpop.f32.mrf.mxu0
      %v2107 = vadd.f32 %v2038, %v2106
      %v2108 = vpop.f32.mrf.mxu0
      %2109 = vmatprep.mubr.f32.mxu0 0.0
      %2110 = vmatmul.mubr.f32.gmra.mxu0 %v2002
      %v2111 = vpop.f32.mrf.mxu0
      %v2112 = vadd.f32 %v2038, %v2111
      %v2113 = vpop.f32.mrf.mxu0
      %2114 = vmatprep.mubr.f32.mxu0 0.0
      %2115 = vmatmul.mubr.f32.gmra.mxu0 %v2003
      %v2116 = vpop.f32.mrf.mxu0
      %v2117 = vadd.f32 %v2038, %v2116
      %v2118 = vpop.f32.mrf.mxu0
      %2119 = vmatprep.mubr.f32.mxu0 0.0
      %2120 = vmatmul.mubr.f32.gmra.mxu0 %v2004
      %v2121 = vpop.f32.mrf.mxu0
      %v2122 = vadd.f32 %v2038, %v2121
      %v2123 = vpop.f32.mrf.mxu0
      %2124 = vmatprep.mubr.f32.mxu0 0.0
      %2125 = vmatmul.mubr.f32.gmra.mxu0 %v2005
      %v2126 = vpop.f32.mrf.mxu0
      %v2127 = vadd.f32 %v2038, %v2126
      %v2128 = vpop.f32.mrf.mxu0
      %2129 = vmatprep.mubr.f32.mxu0 0.0
      %2130 = vmatmul.mubr.f32.gmra.mxu0 %v2006
      %v2131 = vpop.f32.mrf.mxu0
      %v2132 = vadd.f32 %v2038, %v2131
      %v2133 = vpop.f32.mrf.mxu0
      %2134 = vmatprep.mubr.f32.mxu0 0.0
      %2135 = vmatmul.mubr.f32.gmra.mxu0 %v2007
      %v2136 = vpop.f32.mrf.mxu0
      %v2137 = vadd.f32 %v2038, %v2136
      %v2138 = vpop.f32.mrf.mxu0
      %2139 = vmatprep.mubr.f32.mxu0 0.0
      %2140 = vmatmul.mubr.f32.gmra.mxu0 %v2008
      %v2141 = vpop.f32.mrf.mxu0
      %v2142 = vadd.f32 %v2038, %v2141
      %v2143 = vpop.f32.mrf.mxu0
      %2144 = vmatprep.mubr.f32.mxu0 0.0
      %2145 = vmatmul.mubr.f32.gmra.mxu0 %v2009
      %v2146 = vpop.f32.mrf.mxu0
      %v2147 = vadd.f32 %v2038, %v2146
      %v2148 = vpop.f32.mrf.mxu0
      %2149 = vmatprep.mubr.f32.mxu0 0.0
      %2150 = vmatmul.mubr.f32.gmra.mxu0 %v2010
      %v2151 = vpop.f32.mrf.mxu0
      %v2152 = vadd.f32 %v2038, %v2151
      %v2153 = vpop.f32.mrf.mxu0
      %2154 = vmatprep.mubr.f32.mxu0 0.0
      %2155 = vmatmul.mubr.f32.gmra.mxu0 %v2011
      %v2156 = vpop.f32.mrf.mxu0
      %v2157 = vadd.f32 %v2038, %v2156
      %v2158 = vpop.f32.mrf.mxu0
      %2159 = vmatprep.mubr.f32.mxu0 0.0
      %2160 = vmatmul.mubr.f32.gmra.mxu0 %v2012
      %v2161 = vpop.f32.mrf.mxu0
      %v2162 = vadd.f32 %v2038, %v2161
      %v2163 = vpop.f32.mrf.mxu0
      %2164 = vmatprep.mubr.f32.mxu0 0.0
      %2165 = vmatmul.mubr.f32.gmra.mxu0 %v2013
      %v2166 = vpop.f32.mrf.mxu0
      %v2167 = vadd.f32 %v2038, %v2166
      %v2168 = vpop.f32.mrf.mxu0
      %2169 = vmatprep.mubr.f32.mxu0 0.0
      %2170 = vmatmul.mubr.f32.gmra.mxu0 %v2014
      %v2171 = vpop.f32.mrf.mxu0
      %v2172 = vadd.f32 %v2038, %v2171
      %v2173 = vpop.f32.mrf.mxu0
      %2174 = vmatprep.mubr.f32.mxu0 0.0
      %2175 = vmatmul.mubr.f32.gmra.mxu0 %v2015
      %v2176 = vpop.f32.mrf.mxu0
      %v2177 = vadd.f32 %v2038, %v2176
      %v2178 = vpop.f32.mrf.mxu0
      %2179 = vmatprep.mubr.f32.mxu0 0.0
      %2180 = vmatmul.mubr.f32.gmra.mxu0 %v2016
      %v2181 = vpop.f32.mrf.mxu0
      %v2182 = vadd.f32 %v2038, %v2181
      %v2183 = vpop.f32.mrf.mxu0
      %2184 = vdwg.mxu0
      %v2185 = vld [vmem:[%s494] sm:$0xff]
      %v2186 = vld [vmem:[%s494 + $0x8] sm:$0xff]
      %v2187 = vld [vmem:[%s494 + $0x10] sm:$0xff]
      %v2188 = vld [vmem:[%s494 + $0x18] sm:$0xff]
      %v2189 = vld [vmem:[%s494 + $0x20] sm:$0xff]
      %v2190 = vld [vmem:[%s494 + $0x28] sm:$0xff]
      %v2191 = vld [vmem:[%s494 + $0x30] sm:$0xff]
      %v2192 = vld [vmem:[%s494 + $0x38] sm:$0xff]
      %v2193 = vld [vmem:[%s494 + $0x40] sm:$0xff]
      %v2194 = vld [vmem:[%s494 + $0x48] sm:$0xff]
      %v2195 = vld [vmem:[%s494 + $0x50] sm:$0xff]
      %v2196 = vld [vmem:[%s494 + $0x58] sm:$0xff]
      %v2197 = vld [vmem:[%s494 + $0x60] sm:$0xff]
      %v2198 = vld [vmem:[%s494 + $0x68] sm:$0xff]
      %v2199 = vld [vmem:[%s494 + $0x70] sm:$0xff]
      %v2200 = vld [vmem:[%s494 + $0x78] sm:$0xff]
      %v2201 = vmul.f32 %v2107, 0.5
      %v2202 = vmul.f32 %v2112, 0.5
      %v2203 = vmul.f32 %v2117, 0.5
      %v2204 = vmul.f32 %v2122, 0.5
      %v2205 = vmul.f32 %v2127, 0.5
      %v2206 = vmul.f32 %v2132, 0.5
      %v2207 = vmul.f32 %v2137, 0.5
      %v2208 = vmul.f32 %v2142, 0.5
      %v2209 = vmul.f32 %v2147, 0.5
      %v2210 = vmul.f32 %v2152, 0.5
      %v2211 = vmul.f32 %v2157, 0.5
      %v2212 = vmul.f32 %v2162, 0.5
      %v2213 = vmul.f32 %v2167, 0.5
      %v2214 = vmul.f32 %v2172, 0.5
      %v2215 = vmul.f32 %v2177, 0.5
      %v2216 = vmul.f32 %v2182, 0.5
      %v2217 = vmul.f32 %v2201, 1.442695
      %v2218 = vpow.pop %v2217
      %v2219 = vmul.f32 %v2202, 1.442695
      %v2220 = vpow.pop %v2219
      %v2221 = vmul.f32 %v2203, 1.442695
      %v2222 = vpow.pop %v2221
      %v2223 = vmul.f32 %v2204, 1.442695
      %v2224 = vpow.pop %v2223
      %v2225 = vmul.f32 %v2205, 1.442695
      %v2226 = vpow.pop %v2225
      %v2227 = vmul.f32 %v2206, 1.442695
      %v2228 = vpow.pop %v2227
      %v2229 = vmul.f32 %v2207, 1.442695
      %v2230 = vpow.pop %v2229
      %v2231 = vmul.f32 %v2208, 1.442695
      %v2232 = vpow.pop %v2231
      %v2233 = vmul.f32 %v2209, 1.442695
      %v2234 = vpow.pop %v2233
      %v2235 = vmul.f32 %v2210, 1.442695
      %v2236 = vpow.pop %v2235
      %v2237 = vmul.f32 %v2211, 1.442695
      %v2238 = vpow.pop %v2237
      %v2239 = vmul.f32 %v2212, 1.442695
      %v2240 = vpow.pop %v2239
      %v2241 = vmul.f32 %v2213, 1.442695
      %v2242 = vpow.pop %v2241
      %v2243 = vmul.f32 %v2214, 1.442695
      %v2244 = vpow.pop %v2243
      %v2245 = vmul.f32 %v2215, 1.442695
      %v2246 = vpow.pop %v2245
      %v2247 = vmul.f32 %v2216, 1.442695
      %v2248 = vpow.pop %v2247
      %2265 = vrot.lane.b32.xlu0 %v2218, 64
      %v2266 = vpop.permute.xlu0 %2265
      %2267 = vrot.lane.b32.xlu0 %v2220, 64
      %v2268 = vpop.permute.xlu0 %2267
      %2269 = vrot.lane.b32.xlu0 %v2222, 64
      %v2270 = vpop.permute.xlu0 %2269
      %2271 = vrot.lane.b32.xlu0 %v2224, 64
      %v2272 = vpop.permute.xlu0 %2271
      %2273 = vrot.lane.b32.xlu0 %v2226, 64
      %v2274 = vpop.permute.xlu0 %2273
      %2275 = vrot.lane.b32.xlu0 %v2228, 64
      %v2276 = vpop.permute.xlu0 %2275
      %2277 = vrot.lane.b32.xlu0 %v2230, 64
      %v2278 = vpop.permute.xlu0 %2277
      %2279 = vrot.lane.b32.xlu0 %v2232, 64
      %v2280 = vpop.permute.xlu0 %2279
      %2281 = vrot.lane.b32.xlu0 %v2234, 64
      %v2282 = vpop.permute.xlu0 %2281
      %2283 = vrot.lane.b32.xlu0 %v2236, 64
      %v2284 = vpop.permute.xlu0 %2283
      %2285 = vrot.lane.b32.xlu0 %v2238, 64
      %v2286 = vpop.permute.xlu0 %2285
      %2287 = vrot.lane.b32.xlu0 %v2240, 64
      %v2288 = vpop.permute.xlu0 %2287
      %2289 = vrot.lane.b32.xlu0 %v2242, 64
      %v2290 = vpop.permute.xlu0 %2289
      %2291 = vrot.lane.b32.xlu0 %v2244, 64
      %v2292 = vpop.permute.xlu0 %2291
      %2293 = vrot.lane.b32.xlu0 %v2246, 64
      %v2294 = vpop.permute.xlu0 %2293
      %2295 = vrot.lane.b32.xlu0 %v2248, 64
      %v2296 = vpop.permute.xlu0 %2295
      %v2313 = vmul.f32 %v2185, %v2266
      %v2314 = vmul.f32 %v2186, %v2268
      %v2315 = vmul.f32 %v2187, %v2270
      %v2316 = vmul.f32 %v2188, %v2272
      %v2317 = vmul.f32 %v2189, %v2274
      %v2318 = vmul.f32 %v2190, %v2276
      %v2319 = vmul.f32 %v2191, %v2278
      %v2320 = vmul.f32 %v2192, %v2280
      %v2321 = vmul.f32 %v2193, %v2282
      %v2322 = vmul.f32 %v2194, %v2284
      %v2323 = vmul.f32 %v2195, %v2286
      %v2324 = vmul.f32 %v2196, %v2288
      %v2325 = vmul.f32 %v2197, %v2290
      %v2326 = vmul.f32 %v2198, %v2292
      %v2327 = vmul.f32 %v2199, %v2294
      %v2328 = vmul.f32 %v2200, %v2296
      %v2329 = vadd.f32 %v2107, %v2313
      %v2330 = vadd.f32 %v2112, %v2314
      %v2331 = vadd.f32 %v2117, %v2315
      %v2332 = vadd.f32 %v2122, %v2316
      %v2333 = vadd.f32 %v2127, %v2317
      %v2334 = vadd.f32 %v2132, %v2318
      %v2335 = vadd.f32 %v2137, %v2319
      %v2336 = vadd.f32 %v2142, %v2320
      %v2337 = vadd.f32 %v2147, %v2321
      %v2338 = vadd.f32 %v2152, %v2322
      %v2339 = vadd.f32 %v2157, %v2323
      %v2340 = vadd.f32 %v2162, %v2324
      %v2341 = vadd.f32 %v2167, %v2325
      %v2342 = vadd.f32 %v2172, %v2326
      %v2343 = vadd.f32 %v2177, %v2327
      %v2344 = vadd.f32 %v2182, %v2328
      %2345 = vst [vmem:[%s500] sm:$0xff] %v2107
      %2346 = vst [vmem:[%s500 + $0x8] sm:$0xff] %v2112
      %2347 = vst [vmem:[%s500 + $0x10] sm:$0xff] %v2117
      %2348 = vst [vmem:[%s500 + $0x18] sm:$0xff] %v2122
      %2349 = vst [vmem:[%s500 + $0x20] sm:$0xff] %v2127
      %2350 = vst [vmem:[%s500 + $0x28] sm:$0xff] %v2132
      %2351 = vst [vmem:[%s500 + $0x30] sm:$0xff] %v2137
      %2352 = vst [vmem:[%s500 + $0x38] sm:$0xff] %v2142
      %2353 = vst [vmem:[%s500 + $0x40] sm:$0xff] %v2147
      %2354 = vst [vmem:[%s500 + $0x48] sm:$0xff] %v2152
      %2355 = vst [vmem:[%s500 + $0x50] sm:$0xff] %v2157
      %2356 = vst [vmem:[%s500 + $0x58] sm:$0xff] %v2162
      %2357 = vst [vmem:[%s500 + $0x60] sm:$0xff] %v2167
      %2358 = vst [vmem:[%s500 + $0x68] sm:$0xff] %v2172
      %2359 = vst [vmem:[%s500 + $0x70] sm:$0xff] %v2177
      %2360 = vst [vmem:[%s500 + $0x78] sm:$0xff] %v2182
      %vm2361 = vcmask 523264
      %2362 = vst.msk [vmem:[%s506] sm:$0xff] %vm2361, %v2329
      %2363 = vst.msk [vmem:[%s506 + $0x8] sm:$0xff] %vm2361, %v2330
      %2364 = vst.msk [vmem:[%s506 + $0x10] sm:$0xff] %vm2361, %v2331
      %2365 = vst.msk [vmem:[%s506 + $0x18] sm:$0xff] %vm2361, %v2332
      %2366 = vst.msk [vmem:[%s506 + $0x20] sm:$0xff] %vm2361, %v2333
      %2367 = vst.msk [vmem:[%s506 + $0x28] sm:$0xff] %vm2361, %v2334
      %2368 = vst.msk [vmem:[%s506 + $0x30] sm:$0xff] %vm2361, %v2335
      %2369 = vst.msk [vmem:[%s506 + $0x38] sm:$0xff] %vm2361, %v2336
      %2370 = vst.msk [vmem:[%s506 + $0x40] sm:$0xff] %vm2361, %v2337
      %2371 = vst.msk [vmem:[%s506 + $0x48] sm:$0xff] %vm2361, %v2338
      %2372 = vst.msk [vmem:[%s506 + $0x50] sm:$0xff] %vm2361, %v2339
      %2373 = vst.msk [vmem:[%s506 + $0x58] sm:$0xff] %vm2361, %v2340
      %2374 = vst.msk [vmem:[%s506 + $0x60] sm:$0xff] %vm2361, %v2341
      %2375 = vst.msk [vmem:[%s506 + $0x68] sm:$0xff] %vm2361, %v2342
      %2376 = vst.msk [vmem:[%s506 + $0x70] sm:$0xff] %vm2361, %v2343
      %2377 = vst.msk [vmem:[%s506 + $0x78] sm:$0xff] %vm2361, %v2344
      %s2378 = smul.u32 16, %s25
      %p2379 = scmp.lt.s32.totalorder %s2378, 47
      %s2380 = scalar_select %p2379, %s2378, 47
      %s2381 = smul.addr %s2380, 8
      %s2382 = scalar_lea.vmem %s12, %s2381
      %s2383 = smul.u32 16, %s25
      %p2384 = scmp.lt.s32.totalorder %s2383, 47
      %s2385 = scalar_select %p2384, %s2383, 47
      %s2386 = smul.addr %s2385, 8
      %s2387 = scalar_lea.vmem %s13, %s2386
      // Predicated region
      $region69: #{node_encoder_forward.1} parent=67 // pred_check
        %p2388 = pneg %p310
      $region70: #{node_encoder_forward.1} parent=67 // pred_check_branch
        %2390 = sbr.rel (%p2388) target = $region72
      $region71: #{node_encoder_forward.1} parent=67 // pred_region
        %s2391 = smul.u32 16, %s25
      $region72: #{node_encoder_forward.1} parent=67 // pred_fallthru
        _
      // Predicated region
      $region73: #{node_encoder_forward.1} parent=67 // pred_check
        %p2392 = pneg %p336
      $region74: #{node_encoder_forward.1} parent=67 // pred_check_branch
        %2394 = sbr.rel (%p2392) target = $region76
      $region75: #{node_encoder_forward.1} parent=67 // pred_region
        %s2395 = smul.u32 16, %s25
      $region76: #{node_encoder_forward.1} parent=67 // pred_fallthru
        _
    $region68: #{node_encoder_forward.1} parent=5 // pred_fallthru
      _
    %p2396 = scmp.le.s32.totalorder 2, %s20
    // Predicated region
    $region77: #{node_encoder_forward.1} parent=5 // pred_check
      %p2397 = pneg %p2396
    $region78: #{node_encoder_forward.1} parent=5 // pred_check_branch
      %2399 = sbr.rel (%p2397) target = $region80
    $region79: #{node_encoder_forward.1} parent=5 // pred_region
      %s2400 = ssub.s32 %s20, 2
      // Predicated region
      $region81: #{node_encoder_forward.1} parent=79 // pred_check
        %p2401 = pneg %p316
      $region82: #{node_encoder_forward.1} parent=79 // pred_check_branch
        %2403 = sbr.rel (%p2401) target = $region84
      $region83: #{node_encoder_forward.1} parent=79 // pred_region
        %s2404 = smul.u32 16, %s26
        %p2405 = scmp.lt.s32.totalorder %s2404, 47
        %s2406 = scalar_select %p2405, %s2404, 47
        %s2407 = smul.addr %s2406, 8
        %s2408 = scalar_lea.vmem %s12, %s2407
      $region84: #{node_encoder_forward.1} parent=79 // pred_fallthru
        _
      // Predicated region
      $region85: #{node_encoder_forward.1} parent=79 // pred_check
        %p2409 = pneg %p342
      $region86: #{node_encoder_forward.1} parent=79 // pred_check_branch
        %2411 = sbr.rel (%p2409) target = $region88
      $region87: #{node_encoder_forward.1} parent=79 // pred_region
        %s2412 = smul.u32 16, %s26
        %p2413 = scmp.lt.s32.totalorder %s2412, 47
        %s2414 = scalar_select %p2413, %s2412, 47
        %s2415 = smul.addr %s2414, 8
        %s2416 = scalar_lea.vmem %s13, %s2415
      $region88: #{node_encoder_forward.1} parent=79 // pred_fallthru
        _
    $region80: #{node_encoder_forward.1} parent=5 // pred_fallthru
      _
  $region6: #{node_encoder_forward.1} parent=0 // loop_footer
    %s24 = sadd.s32 1, %s20
  $region7: #{node_encoder_forward.1} parent=0 // loop_footer_branch
    %19 = sbr.rel target = $region3
  $region8: #{node_encoder_forward.1} parent=0 // loop_exit
    _

</llo_original>
